<compile_context>
chip_gen: v7x
topology: tpu7x:2x2x1
jax: 0.10.0
libtpu: 0.0.40
codegen_flags: <defaults>
</compile_context>

<pallas_src>
import functools

import jax
import jax.numpy as jnp
import numpy as np
from jax import lax
from jax.experimental import pallas as pl
from jax.experimental.pallas import tpu as pltpu

# ----------------------------- configuration -------------------------------
NUM_USERS = 8
NUM_ITEMS = 16
N_TOTAL = NUM_USERS + NUM_ITEMS
EMBED_DIM = 32          # args.embed_dim  (latent_dim)
N_LAYERS = 2            # args.n_layers
LP1 = N_LAYERS + 1      # number of propagated layers kept (L+1)
ECC_LAYER = 2           # args.ecc_layer -> MLP: Linear(F,H) LeakyReLU Dropout Linear(H,1)
HIDDEN = EMBED_DIM
FEAT = LP1 * LP1        # ecc input dim when args.ecc == False (layer-pair dot products)
LEAKY_SLOPE = 0.01      # nn.LeakyReLU default negative_slope


# ------------------------- fused Pallas kernel ------------------------------
def _make_fused_kernel(batch):
    """Fused kernel: LightGCN propagation + user gather + layer-cross + ecc MLP."""
    B, M, U, D = batch, NUM_ITEMS, NUM_USERS, EMBED_DIM

    def kernel(users_ref,            # SMEM  (B,)   int32 user ids
               graph_ref,            # VMEM  (N, N) normalized adjacency (dense)
               eu_ref, ei_ref,       # VMEM  (U, D), (M, D) base embeddings
               w1_ref, b1_ref,       # VMEM  (H, FEAT), (H, 1)
               w2_ref, b2_ref,       # VMEM  (1, H), (1, 1)
               out_ref,              # VMEM  (1, B*M) rating row (lane-dense)
               e_ref,                # scratch (N, D)       current layer
               uls_ref,              # scratch (LP1*U, D)   user rows per layer
               ir_ref,               # scratch (LP1*M, D)   item rows, row = l*M + i
               ug_ref,               # scratch (LP1*B, D)   gathered users, row = l*B + b
               feats_ref):           # scratch (FEAT, B*M)  lane-dense feature slab
        # ---- 1) LightGCN propagation: E_l = G @ E_{l-1}, l = 1..N_LAYERS ----
        # TODO(synk): torch.sparse.mm has no sparse MXU equivalent; the normalized
        # adjacency is materialized dense and multiplied densely.
        e_ref[0:U, :] = eu_ref[...]
        e_ref[U:N_TOTAL, :] = ei_ref[...]
        uls_ref[0:U, :] = eu_ref[...]
        ir_ref[0:M, :] = ei_ref[...]
        g = graph_ref[...]
        e = e_ref[...]
        for l in range(1, LP1):
            e = jnp.dot(g, e, preferred_element_type=jnp.float32)     # (N, D)
            uls_ref[l * U:(l + 1) * U, :] = e[:U, :]
            ir_ref[l * M:(l + 1) * M, :] = e[U:, :]

        # ---- 2) gather requested users per layer (row order = l1*B + b) ----
        for l1 in range(LP1):
            for b in range(B):
                u = users_ref[b]
                ug_ref[l1 * B + b:l1 * B + b + 1, :] = (
                    uls_ref[pl.ds(l1 * U + u, 1), :])

        # ---- 3) single cross matmul, contracting D (no explicit transpose) ----
        # cross[l1*B + b, l2*M + i] = <user_b at layer l1, item_i at layer l2>
        cross = lax.dot_general(
            ug_ref[...], ir_ref[...],
            dimension_numbers=(((1,), (1,)), ((), ())),
            preferred_element_type=jnp.float32)                       # (LP1*B, LP1*M)

        # ---- 4) lane-dense (FEAT, B*M) feature slab, columns ordered b*M + i ----
        # feats[l1*LP1+l2, b*M+i] = cross[l1*B+b, l2*M+i]  (matches torch ordering)
        for l1 in range(LP1):
            for l2 in range(LP1):
                f = l1 * LP1 + l2
                for b in range(B):
                    feats_ref[f:f + 1, b * M:(b + 1) * M] = (
                        cross[l1 * B + b:l1 * B + b + 1,
                              l2 * M:(l2 + 1) * M])

        # ---- 5) ecc Sequential + sigmoid on the lane-dense slab ----
        x = feats_ref[...]                                            # (FEAT, B*M)
        h = jnp.dot(w1_ref[...], x, preferred_element_type=jnp.float32) + b1_ref[...]
        h = jnp.where(h > 0, h, LEAKY_SLOPE * h)   # LeakyReLU; Dropout(0.5) is identity at eval
        o = jnp.dot(w2_ref[...], h, preferred_element_type=jnp.float32) + b2_ref[...]
        out_ref[...] = jax.nn.sigmoid(o)                              # (1, B*M)

    return kernel


# ------------------------------- wrapper -------------------------------------
@jax.jit
def get_users_rating(graph, users, emb_user, emb_item, w1, b1, w2, b2):
    """Pallas version of LightGCN_ecc.getUsersRating (eval mode, args.ecc=False)."""
    batch = users.shape[0]
    kernel = _make_fused_kernel(batch)
    out = pl.pallas_call(
        kernel,
        out_shape=jax.ShapeDtypeStruct((1, batch * NUM_ITEMS), jnp.float32),
        in_specs=[pl.BlockSpec(memory_space=pltpu.MemorySpace.SMEM)]          # users
        + [pl.BlockSpec(memory_space=pltpu.MemorySpace.VMEM)] * 7,            # tensors
        out_specs=pl.BlockSpec(memory_space=pltpu.MemorySpace.VMEM),
        scratch_shapes=[
            pltpu.VMEM((N_TOTAL, EMBED_DIM), jnp.float32),           # e_ref
            pltpu.VMEM((LP1 * NUM_USERS, EMBED_DIM), jnp.float32),   # uls_ref
            pltpu.VMEM((LP1 * NUM_ITEMS, EMBED_DIM), jnp.float32),   # ir_ref
            pltpu.VMEM((LP1 * batch, EMBED_DIM), jnp.float32),       # ug_ref
            pltpu.VMEM((FEAT, batch * NUM_ITEMS), jnp.float32),      # feats_ref
        ],
    )(users.astype(jnp.int32), graph, emb_user, emb_item,
      w1, b1.reshape(HIDDEN, 1), w2, b2.reshape(1, 1))
    return out.reshape(batch, NUM_ITEMS)                             # rating[u, i]


# ------------------------ plain-JAX reference (torch mirror) ----------------
def reference(graph, users, emb_user, emb_item, w1, b1, w2, b2):
    all_emb = jnp.concatenate([emb_user, emb_item], axis=0)
    e, embs = all_emb, [all_emb]
    for _ in range(N_LAYERS):
        e = graph @ e
        embs.append(e)
    embs = jnp.stack(embs, axis=1)
    all_users, all_items = embs[:NUM_USERS], embs[NUM_USERS:]
    u_emb = all_users[users]                                  # (B, LP1, D)
    items_perm = jnp.transpose(all_items, (1, 0, 2))          # (LP1, M, D)
    rows = []
    for b in range(u_emb.shape[0]):
        for l1 in range(LP1):
            for l2 in range(LP1):
                rows.append(jnp.sum(u_emb[b, l1][None, :] * items_perm[l2],
                                    axis=1, keepdims=True))   # (M, 1)
    lcm = jnp.stack(rows, axis=0)                             # (B*LP1^2, M, 1)
    lcm = lcm.reshape(len(users), LP1 * LP1, NUM_ITEMS, 1)
    lcm = jnp.transpose(lcm, (1, 0, 2, 3))
    lcm = jnp.concatenate([c for c in lcm], axis=-1).reshape(len(users) * NUM_ITEMS, -1)
    h = lcm @ w1.T + b1
    h = jnp.where(h > 0, h, LEAKY_SLOPE * h)
    o = jax.nn.sigmoid(h @ w2.T + b2)
    return o.reshape(len(users), NUM_ITEMS)


# --------------------------------- main --------------------------------------
if __name__ == "__main__":
    key = jax.random.PRNGKey(0)
    ks = jax.random.split(key, 8)

    # Bipartite interaction graph -> symmetric normalized adjacency (dense).
    r = (jax.random.uniform(ks[0], (NUM_USERS, NUM_ITEMS)) < 0.3).astype(jnp.float32)
    adj = jnp.zeros((N_TOTAL, N_TOTAL), jnp.float32)
    adj = adj.at[:NUM_USERS, NUM_USERS:].set(r)
    adj = adj.at[NUM_USERS:, :NUM_USERS].set(r.T)
    deg = adj.sum(axis=1)
    dinv = jnp.where(deg > 0, 1.0 / jnp.sqrt(deg), 0.0)
    graph = dinv[:, None] * adj * dinv[None, :]

    def xavier(k, shape):
        a = float(np.sqrt(6.0 / (shape[0] + shape[1])))
        return jax.random.uniform(k, shape, jnp.float32, -a, a)

    # ecc_layer > 1 -> xavier_uniform init (deterministic, synthetic weights).
    emb_user = xavier(ks[1], (NUM_USERS, EMBED_DIM))
    emb_item = xavier(ks[2], (NUM_ITEMS, EMBED_DIM))
    w1 = xavier(ks[3], (HIDDEN, FEAT))
    b1 = jax.random.uniform(ks[4], (HIDDEN,), jnp.float32, -0.1, 0.1)
    w2 = xavier(ks[5], (1, HIDDEN))
    b2 = jax.random.uniform(ks[6], (1,), jnp.float32, -0.1, 0.1)

    users = jnp.arange(NUM_USERS, dtype=jnp.int32)

    rating = get_users_rating(graph, users, emb_user, emb_item, w1, b1, w2, b2)
    rating = jax.block_until_ready(rating)
    assert rating.shape == (NUM_USERS, NUM_ITEMS)

    ref = reference(graph, users, emb_user, emb_item, w1, b1, w2, b2)
    np.testing.assert_allclose(np.asarray(rating), np.asarray(ref), rtol=1e-5, atol=1e-5)

    print("KERNEL_OK")
</pallas_src>

<mosaic_0001>
module attributes {stable_mosaic.version = 11 : i64} {
  func.func @kernel(%arg0: memref<8xi32, #tpu.memory_space<smem>>, %arg1: memref<24x24xf32, #tpu.memory_space<vmem>>, %arg2: memref<8x32xf32, #tpu.memory_space<vmem>>, %arg3: memref<16x32xf32, #tpu.memory_space<vmem>>, %arg4: memref<32x9xf32, #tpu.memory_space<vmem>>, %arg5: memref<32x1xf32, #tpu.memory_space<vmem>>, %arg6: memref<1x32xf32, #tpu.memory_space<vmem>>, %arg7: memref<1x1xf32, #tpu.memory_space<vmem>>, %arg8: memref<1x128xf32, #tpu.memory_space<vmem>>, %arg9: memref<24x32xf32, #tpu.memory_space<vmem>>, %arg10: memref<24x32xf32, #tpu.memory_space<vmem>>, %arg11: memref<48x32xf32, #tpu.memory_space<vmem>>, %arg12: memref<24x32xf32, #tpu.memory_space<vmem>>, %arg13: memref<9x128xf32, #tpu.memory_space<vmem>>) attributes {dimension_semantics = [], scalar_prefetch = 0 : i64, scratch_operands = 5 : i64, tpu.core_type = #tpu.core_type<tc>} {
    %c0 = arith.constant 0 : index
    %c0_0 = arith.constant 0 : index
    %0 = vector.load %arg2[%c0, %c0_0] : memref<8x32xf32, #tpu.memory_space<vmem>>, vector<8x32xf32>
    %c0_1 = arith.constant 0 : index
    %c0_2 = arith.constant 0 : index
    %1 = vector.load %arg9[%c0_1, %c0_2] : memref<24x32xf32, #tpu.memory_space<vmem>>, vector<8x32xf32>
    tpu.vector_store %arg9[%c0_1, %c0_2], %0 {strides = array<i32>} : memref<24x32xf32, #tpu.memory_space<vmem>>, vector<8x32xf32>,
    %c0_3 = arith.constant 0 : index
    %c0_4 = arith.constant 0 : index
    %2 = vector.load %arg3[%c0_3, %c0_4] : memref<16x32xf32, #tpu.memory_space<vmem>>, vector<16x32xf32>
    %c8 = arith.constant 8 : index
    %c0_5 = arith.constant 0 : index
    %3 = vector.load %arg9[%c8, %c0_5] : memref<24x32xf32, #tpu.memory_space<vmem>>, vector<16x32xf32>
    tpu.vector_store %arg9[%c8, %c0_5], %2 {strides = array<i32>} : memref<24x32xf32, #tpu.memory_space<vmem>>, vector<16x32xf32>,
    %c0_6 = arith.constant 0 : index
    %c0_7 = arith.constant 0 : index
    %4 = vector.load %arg2[%c0_6, %c0_7] : memref<8x32xf32, #tpu.memory_space<vmem>>, vector<8x32xf32>
    %c0_8 = arith.constant 0 : index
    %c0_9 = arith.constant 0 : index
    %5 = vector.load %arg10[%c0_8, %c0_9] : memref<24x32xf32, #tpu.memory_space<vmem>>, vector<8x32xf32>
    tpu.vector_store %arg10[%c0_8, %c0_9], %4 {strides = array<i32>} : memref<24x32xf32, #tpu.memory_space<vmem>>, vector<8x32xf32>,
    %c0_10 = arith.constant 0 : index
    %c0_11 = arith.constant 0 : index
    %6 = vector.load %arg3[%c0_10, %c0_11] : memref<16x32xf32, #tpu.memory_space<vmem>>, vector<16x32xf32>
    %c0_12 = arith.constant 0 : index
    %c0_13 = arith.constant 0 : index
    %7 = vector.load %arg11[%c0_12, %c0_13] : memref<48x32xf32, #tpu.memory_space<vmem>>, vector<16x32xf32>
    tpu.vector_store %arg11[%c0_12, %c0_13], %6 {strides = array<i32>} : memref<48x32xf32, #tpu.memory_space<vmem>>, vector<16x32xf32>,
    %c0_14 = arith.constant 0 : index
    %c0_15 = arith.constant 0 : index
    %8 = vector.load %arg1[%c0_14, %c0_15] : memref<24x24xf32, #tpu.memory_space<vmem>>, vector<24x24xf32>
    %c0_16 = arith.constant 0 : index
    %c0_17 = arith.constant 0 : index
    %9 = vector.load %arg9[%c0_16, %c0_17] : memref<24x32xf32, #tpu.memory_space<vmem>>, vector<24x32xf32>
    %cst = arith.constant dense<0.000000e+00> : vector<24x32xf32>
    %10 = tpu.matmul %8, %9, %cst {dimension_numbers = #tpu.dot_dimension_numbers<[1], [0], [0], [1], [0, 0, 1, 1], [], []>} : vector<24x24xf32>, vector<24x32xf32>, vector<24x32xf32> -> vector<24x32xf32>
    %11 = vector.extract_strided_slice %10 {offsets = [0, 0], sizes = [8, 32], strides = [1, 1]} : vector<24x32xf32> to vector<8x32xf32>
    %c8_18 = arith.constant 8 : index
    %c0_19 = arith.constant 0 : index
    %12 = vector.load %arg10[%c8_18, %c0_19] : memref<24x32xf32, #tpu.memory_space<vmem>>, vector<8x32xf32>
    tpu.vector_store %arg10[%c8_18, %c0_19], %11 {strides = array<i32>} : memref<24x32xf32, #tpu.memory_space<vmem>>, vector<8x32xf32>,
    %13 = vector.extract_strided_slice %10 {offsets = [8, 0], sizes = [16, 32], strides = [1, 1]} : vector<24x32xf32> to vector<16x32xf32>
    %c16 = arith.constant 16 : index
    %c0_20 = arith.constant 0 : index
    %14 = vector.load %arg11[%c16, %c0_20] : memref<48x32xf32, #tpu.memory_space<vmem>>, vector<16x32xf32>
    tpu.vector_store %arg11[%c16, %c0_20], %13 {strides = array<i32>} : memref<48x32xf32, #tpu.memory_space<vmem>>, vector<16x32xf32>,
    %cst_21 = arith.constant dense<0.000000e+00> : vector<24x32xf32>
    %15 = tpu.matmul %8, %10, %cst_21 {dimension_numbers = #tpu.dot_dimension_numbers<[1], [0], [0], [1], [0, 0, 1, 1], [], []>} : vector<24x24xf32>, vector<24x32xf32>, vector<24x32xf32> -> vector<24x32xf32>
    %16 = vector.extract_strided_slice %15 {offsets = [0, 0], sizes = [8, 32], strides = [1, 1]} : vector<24x32xf32> to vector<8x32xf32>
    %c16_22 = arith.constant 16 : index
    %c0_23 = arith.constant 0 : index
    %17 = vector.load %arg10[%c16_22, %c0_23] : memref<24x32xf32, #tpu.memory_space<vmem>>, vector<8x32xf32>
    tpu.vector_store %arg10[%c16_22, %c0_23], %16 {strides = array<i32>} : memref<24x32xf32, #tpu.memory_space<vmem>>, vector<8x32xf32>,
    %18 = vector.extract_strided_slice %15 {offsets = [8, 0], sizes = [16, 32], strides = [1, 1]} : vector<24x32xf32> to vector<16x32xf32>
    %c32 = arith.constant 32 : index
    %c0_24 = arith.constant 0 : index
    %19 = vector.load %arg11[%c32, %c0_24] : memref<48x32xf32, #tpu.memory_space<vmem>>, vector<16x32xf32>
    tpu.vector_store %arg11[%c32, %c0_24], %18 {strides = array<i32>} : memref<48x32xf32, #tpu.memory_space<vmem>>, vector<16x32xf32>,
    %c0_25 = arith.constant 0 : index
    %20 = memref.load %arg0[%c0_25] : memref<8xi32, #tpu.memory_space<smem>>
    %c0_i32 = arith.constant 0 : i32
    %21 = arith.addi %c0_i32, %20 : i32
    %22 = arith.index_cast %21 : i32 to index
    %c0_26 = arith.constant 0 : index
    %23 = vector.load %arg10[%22, %c0_26] : memref<24x32xf32, #tpu.memory_space<vmem>>, vector<1x32xf32>
    %c0_27 = arith.constant 0 : index
    %c0_28 = arith.constant 0 : index
    %24 = vector.load %arg12[%c0_27, %c0_28] : memref<24x32xf32, #tpu.memory_space<vmem>>, vector<1x32xf32>
    tpu.vector_store %arg12[%c0_27, %c0_28], %23 {strides = array<i32>} : memref<24x32xf32, #tpu.memory_space<vmem>>, vector<1x32xf32>,
    %c1 = arith.constant 1 : index
    %25 = memref.load %arg0[%c1] : memref<8xi32, #tpu.memory_space<smem>>
    %c0_i32_29 = arith.constant 0 : i32
    %26 = arith.addi %c0_i32_29, %25 : i32
    %27 = arith.index_cast %26 : i32 to index
    %c0_30 = arith.constant 0 : index
    %28 = vector.load %arg10[%27, %c0_30] : memref<24x32xf32, #tpu.memory_space<vmem>>, vector<1x32xf32>
    %c1_31 = arith.constant 1 : index
    %c0_32 = arith.constant 0 : index
    %29 = vector.load %arg12[%c1_31, %c0_32] : memref<24x32xf32, #tpu.memory_space<vmem>>, vector<1x32xf32>
    tpu.vector_store %arg12[%c1_31, %c0_32], %28 {strides = array<i32>} : memref<24x32xf32, #tpu.memory_space<vmem>>, vector<1x32xf32>,
    %c2 = arith.constant 2 : index
    %30 = memref.load %arg0[%c2] : memref<8xi32, #tpu.memory_space<smem>>
    %c0_i32_33 = arith.constant 0 : i32
    %31 = arith.addi %c0_i32_33, %30 : i32
    %32 = arith.index_cast %31 : i32 to index
    %c0_34 = arith.constant 0 : index
    %33 = vector.load %arg10[%32, %c0_34] : memref<24x32xf32, #tpu.memory_space<vmem>>, vector<1x32xf32>
    %c2_35 = arith.constant 2 : index
    %c0_36 = arith.constant 0 : index
    %34 = vector.load %arg12[%c2_35, %c0_36] : memref<24x32xf32, #tpu.memory_space<vmem>>, vector<1x32xf32>
    tpu.vector_store %arg12[%c2_35, %c0_36], %33 {strides = array<i32>} : memref<24x32xf32, #tpu.memory_space<vmem>>, vector<1x32xf32>,
    %c3 = arith.constant 3 : index
    %35 = memref.load %arg0[%c3] : memref<8xi32, #tpu.memory_space<smem>>
    %c0_i32_37 = arith.constant 0 : i32
    %36 = arith.addi %c0_i32_37, %35 : i32
    %37 = arith.index_cast %36 : i32 to index
    %c0_38 = arith.constant 0 : index
    %38 = vector.load %arg10[%37, %c0_38] : memref<24x32xf32, #tpu.memory_space<vmem>>, vector<1x32xf32>
    %c3_39 = arith.constant 3 : index
    %c0_40 = arith.constant 0 : index
    %39 = vector.load %arg12[%c3_39, %c0_40] : memref<24x32xf32, #tpu.memory_space<vmem>>, vector<1x32xf32>
    tpu.vector_store %arg12[%c3_39, %c0_40], %38 {strides = array<i32>} : memref<24x32xf32, #tpu.memory_space<vmem>>, vector<1x32xf32>,
    %c4 = arith.constant 4 : index
    %40 = memref.load %arg0[%c4] : memref<8xi32, #tpu.memory_space<smem>>
    %c0_i32_41 = arith.constant 0 : i32
    %41 = arith.addi %c0_i32_41, %40 : i32
    %42 = arith.index_cast %41 : i32 to index
    %c0_42 = arith.constant 0 : index
    %43 = vector.load %arg10[%42, %c0_42] : memref<24x32xf32, #tpu.memory_space<vmem>>, vector<1x32xf32>
    %c4_43 = arith.constant 4 : index
    %c0_44 = arith.constant 0 : index
    %44 = vector.load %arg12[%c4_43, %c0_44] : memref<24x32xf32, #tpu.memory_space<vmem>>, vector<1x32xf32>
    tpu.vector_store %arg12[%c4_43, %c0_44], %43 {strides = array<i32>} : memref<24x32xf32, #tpu.memory_space<vmem>>, vector<1x32xf32>,
    %c5 = arith.constant 5 : index
    %45 = memref.load %arg0[%c5] : memref<8xi32, #tpu.memory_space<smem>>
    %c0_i32_45 = arith.constant 0 : i32
    %46 = arith.addi %c0_i32_45, %45 : i32
    %47 = arith.index_cast %46 : i32 to index
    %c0_46 = arith.constant 0 : index
    %48 = vector.load %arg10[%47, %c0_46] : memref<24x32xf32, #tpu.memory_space<vmem>>, vector<1x32xf32>
    %c5_47 = arith.constant 5 : index
    %c0_48 = arith.constant 0 : index
    %49 = vector.load %arg12[%c5_47, %c0_48] : memref<24x32xf32, #tpu.memory_space<vmem>>, vector<1x32xf32>
    tpu.vector_store %arg12[%c5_47, %c0_48], %48 {strides = array<i32>} : memref<24x32xf32, #tpu.memory_space<vmem>>, vector<1x32xf32>,
    %c6 = arith.constant 6 : index
    %50 = memref.load %arg0[%c6] : memref<8xi32, #tpu.memory_space<smem>>
    %c0_i32_49 = arith.constant 0 : i32
    %51 = arith.addi %c0_i32_49, %50 : i32
    %52 = arith.index_cast %51 : i32 to index
    %c0_50 = arith.constant 0 : index
    %53 = vector.load %arg10[%52, %c0_50] : memref<24x32xf32, #tpu.memory_space<vmem>>, vector<1x32xf32>
    %c6_51 = arith.constant 6 : index
    %c0_52 = arith.constant 0 : index
    %54 = vector.load %arg12[%c6_51, %c0_52] : memref<24x32xf32, #tpu.memory_space<vmem>>, vector<1x32xf32>
    tpu.vector_store %arg12[%c6_51, %c0_52], %53 {strides = array<i32>} : memref<24x32xf32, #tpu.memory_space<vmem>>, vector<1x32xf32>,
    %c7 = arith.constant 7 : index
    %55 = memref.load %arg0[%c7] : memref<8xi32, #tpu.memory_space<smem>>
    %c0_i32_53 = arith.constant 0 : i32
    %56 = arith.addi %c0_i32_53, %55 : i32
    %57 = arith.index_cast %56 : i32 to index
    %c0_54 = arith.constant 0 : index
    %58 = vector.load %arg10[%57, %c0_54] : memref<24x32xf32, #tpu.memory_space<vmem>>, vector<1x32xf32>
    %c7_55 = arith.constant 7 : index
    %c0_56 = arith.constant 0 : index
    %59 = vector.load %arg12[%c7_55, %c0_56] : memref<24x32xf32, #tpu.memory_space<vmem>>, vector<1x32xf32>
    tpu.vector_store %arg12[%c7_55, %c0_56], %58 {strides = array<i32>} : memref<24x32xf32, #tpu.memory_space<vmem>>, vector<1x32xf32>,
    %c0_57 = arith.constant 0 : index
    %60 = memref.load %arg0[%c0_57] : memref<8xi32, #tpu.memory_space<smem>>
    %c8_i32 = arith.constant 8 : i32
    %61 = arith.addi %c8_i32, %60 : i32
    %62 = arith.index_cast %61 : i32 to index
    %c0_58 = arith.constant 0 : index
    %63 = vector.load %arg10[%62, %c0_58] : memref<24x32xf32, #tpu.memory_space<vmem>>, vector<1x32xf32>
    %c8_59 = arith.constant 8 : index
    %c0_60 = arith.constant 0 : index
    %64 = vector.load %arg12[%c8_59, %c0_60] : memref<24x32xf32, #tpu.memory_space<vmem>>, vector<1x32xf32>
    tpu.vector_store %arg12[%c8_59, %c0_60], %63 {strides = array<i32>} : memref<24x32xf32, #tpu.memory_space<vmem>>, vector<1x32xf32>,
    %c1_61 = arith.constant 1 : index
    %65 = memref.load %arg0[%c1_61] : memref<8xi32, #tpu.memory_space<smem>>
    %c8_i32_62 = arith.constant 8 : i32
    %66 = arith.addi %c8_i32_62, %65 : i32
    %67 = arith.index_cast %66 : i32 to index
    %c0_63 = arith.constant 0 : index
    %68 = vector.load %arg10[%67, %c0_63] : memref<24x32xf32, #tpu.memory_space<vmem>>, vector<1x32xf32>
    %c9 = arith.constant 9 : index
    %c0_64 = arith.constant 0 : index
    %69 = vector.load %arg12[%c9, %c0_64] : memref<24x32xf32, #tpu.memory_space<vmem>>, vector<1x32xf32>
    tpu.vector_store %arg12[%c9, %c0_64], %68 {strides = array<i32>} : memref<24x32xf32, #tpu.memory_space<vmem>>, vector<1x32xf32>,
    %c2_65 = arith.constant 2 : index
    %70 = memref.load %arg0[%c2_65] : memref<8xi32, #tpu.memory_space<smem>>
    %c8_i32_66 = arith.constant 8 : i32
    %71 = arith.addi %c8_i32_66, %70 : i32
    %72 = arith.index_cast %71 : i32 to index
    %c0_67 = arith.constant 0 : index
    %73 = vector.load %arg10[%72, %c0_67] : memref<24x32xf32, #tpu.memory_space<vmem>>, vector<1x32xf32>
    %c10 = arith.constant 10 : index
    %c0_68 = arith.constant 0 : index
    %74 = vector.load %arg12[%c10, %c0_68] : memref<24x32xf32, #tpu.memory_space<vmem>>, vector<1x32xf32>
    tpu.vector_store %arg12[%c10, %c0_68], %73 {strides = array<i32>} : memref<24x32xf32, #tpu.memory_space<vmem>>, vector<1x32xf32>,
    %c3_69 = arith.constant 3 : index
    %75 = memref.load %arg0[%c3_69] : memref<8xi32, #tpu.memory_space<smem>>
    %c8_i32_70 = arith.constant 8 : i32
    %76 = arith.addi %c8_i32_70, %75 : i32
    %77 = arith.index_cast %76 : i32 to index
    %c0_71 = arith.constant 0 : index
    %78 = vector.load %arg10[%77, %c0_71] : memref<24x32xf32, #tpu.memory_space<vmem>>, vector<1x32xf32>
    %c11 = arith.constant 11 : index
    %c0_72 = arith.constant 0 : index
    %79 = vector.load %arg12[%c11, %c0_72] : memref<24x32xf32, #tpu.memory_space<vmem>>, vector<1x32xf32>
    tpu.vector_store %arg12[%c11, %c0_72], %78 {strides = array<i32>} : memref<24x32xf32, #tpu.memory_space<vmem>>, vector<1x32xf32>,
    %c4_73 = arith.constant 4 : index
    %80 = memref.load %arg0[%c4_73] : memref<8xi32, #tpu.memory_space<smem>>
    %c8_i32_74 = arith.constant 8 : i32
    %81 = arith.addi %c8_i32_74, %80 : i32
    %82 = arith.index_cast %81 : i32 to index
    %c0_75 = arith.constant 0 : index
    %83 = vector.load %arg10[%82, %c0_75] : memref<24x32xf32, #tpu.memory_space<vmem>>, vector<1x32xf32>
    %c12 = arith.constant 12 : index
    %c0_76 = arith.constant 0 : index
    %84 = vector.load %arg12[%c12, %c0_76] : memref<24x32xf32, #tpu.memory_space<vmem>>, vector<1x32xf32>
    tpu.vector_store %arg12[%c12, %c0_76], %83 {strides = array<i32>} : memref<24x32xf32, #tpu.memory_space<vmem>>, vector<1x32xf32>,
    %c5_77 = arith.constant 5 : index
    %85 = memref.load %arg0[%c5_77] : memref<8xi32, #tpu.memory_space<smem>>
    %c8_i32_78 = arith.constant 8 : i32
    %86 = arith.addi %c8_i32_78, %85 : i32
    %87 = arith.index_cast %86 : i32 to index
    %c0_79 = arith.constant 0 : index
    %88 = vector.load %arg10[%87, %c0_79] : memref<24x32xf32, #tpu.memory_space<vmem>>, vector<1x32xf32>
    %c13 = arith.constant 13 : index
    %c0_80 = arith.constant 0 : index
    %89 = vector.load %arg12[%c13, %c0_80] : memref<24x32xf32, #tpu.memory_space<vmem>>, vector<1x32xf32>
    tpu.vector_store %arg12[%c13, %c0_80], %88 {strides = array<i32>} : memref<24x32xf32, #tpu.memory_space<vmem>>, vector<1x32xf32>,
    %c6_81 = arith.constant 6 : index
    %90 = memref.load %arg0[%c6_81] : memref<8xi32, #tpu.memory_space<smem>>
    %c8_i32_82 = arith.constant 8 : i32
    %91 = arith.addi %c8_i32_82, %90 : i32
    %92 = arith.index_cast %91 : i32 to index
    %c0_83 = arith.constant 0 : index
    %93 = vector.load %arg10[%92, %c0_83] : memref<24x32xf32, #tpu.memory_space<vmem>>, vector<1x32xf32>
    %c14 = arith.constant 14 : index
    %c0_84 = arith.constant 0 : index
    %94 = vector.load %arg12[%c14, %c0_84] : memref<24x32xf32, #tpu.memory_space<vmem>>, vector<1x32xf32>
    tpu.vector_store %arg12[%c14, %c0_84], %93 {strides = array<i32>} : memref<24x32xf32, #tpu.memory_space<vmem>>, vector<1x32xf32>,
    %c7_85 = arith.constant 7 : index
    %95 = memref.load %arg0[%c7_85] : memref<8xi32, #tpu.memory_space<smem>>
    %c8_i32_86 = arith.constant 8 : i32
    %96 = arith.addi %c8_i32_86, %95 : i32
    %97 = arith.index_cast %96 : i32 to index
    %c0_87 = arith.constant 0 : index
    %98 = vector.load %arg10[%97, %c0_87] : memref<24x32xf32, #tpu.memory_space<vmem>>, vector<1x32xf32>
    %c15 = arith.constant 15 : index
    %c0_88 = arith.constant 0 : index
    %99 = vector.load %arg12[%c15, %c0_88] : memref<24x32xf32, #tpu.memory_space<vmem>>, vector<1x32xf32>
    tpu.vector_store %arg12[%c15, %c0_88], %98 {strides = array<i32>} : memref<24x32xf32, #tpu.memory_space<vmem>>, vector<1x32xf32>,
    %c0_89 = arith.constant 0 : index
    %100 = memref.load %arg0[%c0_89] : memref<8xi32, #tpu.memory_space<smem>>
    %c16_i32 = arith.constant 16 : i32
    %101 = arith.addi %c16_i32, %100 : i32
    %102 = arith.index_cast %101 : i32 to index
    %c0_90 = arith.constant 0 : index
    %103 = vector.load %arg10[%102, %c0_90] : memref<24x32xf32, #tpu.memory_space<vmem>>, vector<1x32xf32>
    %c16_91 = arith.constant 16 : index
    %c0_92 = arith.constant 0 : index
    %104 = vector.load %arg12[%c16_91, %c0_92] : memref<24x32xf32, #tpu.memory_space<vmem>>, vector<1x32xf32>
    tpu.vector_store %arg12[%c16_91, %c0_92], %103 {strides = array<i32>} : memref<24x32xf32, #tpu.memory_space<vmem>>, vector<1x32xf32>,
    %c1_93 = arith.constant 1 : index
    %105 = memref.load %arg0[%c1_93] : memref<8xi32, #tpu.memory_space<smem>>
    %c16_i32_94 = arith.constant 16 : i32
    %106 = arith.addi %c16_i32_94, %105 : i32
    %107 = arith.index_cast %106 : i32 to index
    %c0_95 = arith.constant 0 : index
    %108 = vector.load %arg10[%107, %c0_95] : memref<24x32xf32, #tpu.memory_space<vmem>>, vector<1x32xf32>
    %c17 = arith.constant 17 : index
    %c0_96 = arith.constant 0 : index
    %109 = vector.load %arg12[%c17, %c0_96] : memref<24x32xf32, #tpu.memory_space<vmem>>, vector<1x32xf32>
    tpu.vector_store %arg12[%c17, %c0_96], %108 {strides = array<i32>} : memref<24x32xf32, #tpu.memory_space<vmem>>, vector<1x32xf32>,
    %c2_97 = arith.constant 2 : index
    %110 = memref.load %arg0[%c2_97] : memref<8xi32, #tpu.memory_space<smem>>
    %c16_i32_98 = arith.constant 16 : i32
    %111 = arith.addi %c16_i32_98, %110 : i32
    %112 = arith.index_cast %111 : i32 to index
    %c0_99 = arith.constant 0 : index
    %113 = vector.load %arg10[%112, %c0_99] : memref<24x32xf32, #tpu.memory_space<vmem>>, vector<1x32xf32>
    %c18 = arith.constant 18 : index
    %c0_100 = arith.constant 0 : index
    %114 = vector.load %arg12[%c18, %c0_100] : memref<24x32xf32, #tpu.memory_space<vmem>>, vector<1x32xf32>
    tpu.vector_store %arg12[%c18, %c0_100], %113 {strides = array<i32>} : memref<24x32xf32, #tpu.memory_space<vmem>>, vector<1x32xf32>,
    %c3_101 = arith.constant 3 : index
    %115 = memref.load %arg0[%c3_101] : memref<8xi32, #tpu.memory_space<smem>>
    %c16_i32_102 = arith.constant 16 : i32
    %116 = arith.addi %c16_i32_102, %115 : i32
    %117 = arith.index_cast %116 : i32 to index
    %c0_103 = arith.constant 0 : index
    %118 = vector.load %arg10[%117, %c0_103] : memref<24x32xf32, #tpu.memory_space<vmem>>, vector<1x32xf32>
    %c19 = arith.constant 19 : index
    %c0_104 = arith.constant 0 : index
    %119 = vector.load %arg12[%c19, %c0_104] : memref<24x32xf32, #tpu.memory_space<vmem>>, vector<1x32xf32>
    tpu.vector_store %arg12[%c19, %c0_104], %118 {strides = array<i32>} : memref<24x32xf32, #tpu.memory_space<vmem>>, vector<1x32xf32>,
    %c4_105 = arith.constant 4 : index
    %120 = memref.load %arg0[%c4_105] : memref<8xi32, #tpu.memory_space<smem>>
    %c16_i32_106 = arith.constant 16 : i32
    %121 = arith.addi %c16_i32_106, %120 : i32
    %122 = arith.index_cast %121 : i32 to index
    %c0_107 = arith.constant 0 : index
    %123 = vector.load %arg10[%122, %c0_107] : memref<24x32xf32, #tpu.memory_space<vmem>>, vector<1x32xf32>
    %c20 = arith.constant 20 : index
    %c0_108 = arith.constant 0 : index
    %124 = vector.load %arg12[%c20, %c0_108] : memref<24x32xf32, #tpu.memory_space<vmem>>, vector<1x32xf32>
    tpu.vector_store %arg12[%c20, %c0_108], %123 {strides = array<i32>} : memref<24x32xf32, #tpu.memory_space<vmem>>, vector<1x32xf32>,
    %c5_109 = arith.constant 5 : index
    %125 = memref.load %arg0[%c5_109] : memref<8xi32, #tpu.memory_space<smem>>
    %c16_i32_110 = arith.constant 16 : i32
    %126 = arith.addi %c16_i32_110, %125 : i32
    %127 = arith.index_cast %126 : i32 to index
    %c0_111 = arith.constant 0 : index
    %128 = vector.load %arg10[%127, %c0_111] : memref<24x32xf32, #tpu.memory_space<vmem>>, vector<1x32xf32>
    %c21 = arith.constant 21 : index
    %c0_112 = arith.constant 0 : index
    %129 = vector.load %arg12[%c21, %c0_112] : memref<24x32xf32, #tpu.memory_space<vmem>>, vector<1x32xf32>
    tpu.vector_store %arg12[%c21, %c0_112], %128 {strides = array<i32>} : memref<24x32xf32, #tpu.memory_space<vmem>>, vector<1x32xf32>,
    %c6_113 = arith.constant 6 : index
    %130 = memref.load %arg0[%c6_113] : memref<8xi32, #tpu.memory_space<smem>>
    %c16_i32_114 = arith.constant 16 : i32
    %131 = arith.addi %c16_i32_114, %130 : i32
    %132 = arith.index_cast %131 : i32 to index
    %c0_115 = arith.constant 0 : index
    %133 = vector.load %arg10[%132, %c0_115] : memref<24x32xf32, #tpu.memory_space<vmem>>, vector<1x32xf32>
    %c22 = arith.constant 22 : index
    %c0_116 = arith.constant 0 : index
    %134 = vector.load %arg12[%c22, %c0_116] : memref<24x32xf32, #tpu.memory_space<vmem>>, vector<1x32xf32>
    tpu.vector_store %arg12[%c22, %c0_116], %133 {strides = array<i32>} : memref<24x32xf32, #tpu.memory_space<vmem>>, vector<1x32xf32>,
    %c7_117 = arith.constant 7 : index
    %135 = memref.load %arg0[%c7_117] : memref<8xi32, #tpu.memory_space<smem>>
    %c16_i32_118 = arith.constant 16 : i32
    %136 = arith.addi %c16_i32_118, %135 : i32
    %137 = arith.index_cast %136 : i32 to index
    %c0_119 = arith.constant 0 : index
    %138 = vector.load %arg10[%137, %c0_119] : memref<24x32xf32, #tpu.memory_space<vmem>>, vector<1x32xf32>
    %c23 = arith.constant 23 : index
    %c0_120 = arith.constant 0 : index
    %139 = vector.load %arg12[%c23, %c0_120] : memref<24x32xf32, #tpu.memory_space<vmem>>, vector<1x32xf32>
    tpu.vector_store %arg12[%c23, %c0_120], %138 {strides = array<i32>} : memref<24x32xf32, #tpu.memory_space<vmem>>, vector<1x32xf32>,
    %c0_121 = arith.constant 0 : index
    %c0_122 = arith.constant 0 : index
    %140 = vector.load %arg12[%c0_121, %c0_122] : memref<24x32xf32, #tpu.memory_space<vmem>>, vector<24x32xf32>
    %c0_123 = arith.constant 0 : index
    %c0_124 = arith.constant 0 : index
    %141 = vector.load %arg11[%c0_123, %c0_124] : memref<48x32xf32, #tpu.memory_space<vmem>>, vector<48x32xf32>
    %cst_125 = arith.constant dense<0.000000e+00> : vector<24x48xf32>
    %142 = tpu.matmul %140, %141, %cst_125 {dimension_numbers = #tpu.dot_dimension_numbers<[1], [1], [0], [0], [0, 0, 1, 0], [], []>} : vector<24x32xf32>, vector<48x32xf32>, vector<24x48xf32> -> vector<24x48xf32>
    %143 = vector.extract_strided_slice %142 {offsets = [0, 0], sizes = [1, 16], strides = [1, 1]} : vector<24x48xf32> to vector<1x16xf32>
    %c0_126 = arith.constant 0 : index
    %c0_127 = arith.constant 0 : index
    %144 = vector.load %arg13[%c0_126, %c0_127] : memref<9x128xf32, #tpu.memory_space<vmem>>, vector<1x16xf32>
    tpu.vector_store %arg13[%c0_126, %c0_127], %143 {strides = array<i32>} : memref<9x128xf32, #tpu.memory_space<vmem>>, vector<1x16xf32>,
    %145 = vector.extract_strided_slice %142 {offsets = [1, 0], sizes = [1, 16], strides = [1, 1]} : vector<24x48xf32> to vector<1x16xf32>
    %c0_128 = arith.constant 0 : index
    %c16_129 = arith.constant 16 : index
    %146 = vector.load %arg13[%c0_128, %c16_129] : memref<9x128xf32, #tpu.memory_space<vmem>>, vector<1x16xf32>
    tpu.vector_store %arg13[%c0_128, %c16_129], %145 {strides = array<i32>} : memref<9x128xf32, #tpu.memory_space<vmem>>, vector<1x16xf32>,
    %147 = vector.extract_strided_slice %142 {offsets = [2, 0], sizes = [1, 16], strides = [1, 1]} : vector<24x48xf32> to vector<1x16xf32>
    %c0_130 = arith.constant 0 : index
    %c32_131 = arith.constant 32 : index
    %148 = vector.load %arg13[%c0_130, %c32_131] : memref<9x128xf32, #tpu.memory_space<vmem>>, vector<1x16xf32>
    tpu.vector_store %arg13[%c0_130, %c32_131], %147 {strides = array<i32>} : memref<9x128xf32, #tpu.memory_space<vmem>>, vector<1x16xf32>,
    %149 = vector.extract_strided_slice %142 {offsets = [3, 0], sizes = [1, 16], strides = [1, 1]} : vector<24x48xf32> to vector<1x16xf32>
    %c0_132 = arith.constant 0 : index
    %c48 = arith.constant 48 : index
    %150 = vector.load %arg13[%c0_132, %c48] : memref<9x128xf32, #tpu.memory_space<vmem>>, vector<1x16xf32>
    tpu.vector_store %arg13[%c0_132, %c48], %149 {strides = array<i32>} : memref<9x128xf32, #tpu.memory_space<vmem>>, vector<1x16xf32>,
    %151 = vector.extract_strided_slice %142 {offsets = [4, 0], sizes = [1, 16], strides = [1, 1]} : vector<24x48xf32> to vector<1x16xf32>
    %c0_133 = arith.constant 0 : index
    %c64 = arith.constant 64 : index
    %152 = vector.load %arg13[%c0_133, %c64] : memref<9x128xf32, #tpu.memory_space<vmem>>, vector<1x16xf32>
    tpu.vector_store %arg13[%c0_133, %c64], %151 {strides = array<i32>} : memref<9x128xf32, #tpu.memory_space<vmem>>, vector<1x16xf32>,
    %153 = vector.extract_strided_slice %142 {offsets = [5, 0], sizes = [1, 16], strides = [1, 1]} : vector<24x48xf32> to vector<1x16xf32>
    %c0_134 = arith.constant 0 : index
    %c80 = arith.constant 80 : index
    %154 = vector.load %arg13[%c0_134, %c80] : memref<9x128xf32, #tpu.memory_space<vmem>>, vector<1x16xf32>
    tpu.vector_store %arg13[%c0_134, %c80], %153 {strides = array<i32>} : memref<9x128xf32, #tpu.memory_space<vmem>>, vector<1x16xf32>,
    %155 = vector.extract_strided_slice %142 {offsets = [6, 0], sizes = [1, 16], strides = [1, 1]} : vector<24x48xf32> to vector<1x16xf32>
    %c0_135 = arith.constant 0 : index
    %c96 = arith.constant 96 : index
    %156 = vector.load %arg13[%c0_135, %c96] : memref<9x128xf32, #tpu.memory_space<vmem>>, vector<1x16xf32>
    tpu.vector_store %arg13[%c0_135, %c96], %155 {strides = array<i32>} : memref<9x128xf32, #tpu.memory_space<vmem>>, vector<1x16xf32>,
    %157 = vector.extract_strided_slice %142 {offsets = [7, 0], sizes = [1, 16], strides = [1, 1]} : vector<24x48xf32> to vector<1x16xf32>
    %c0_136 = arith.constant 0 : index
    %c112 = arith.constant 112 : index
    %158 = vector.load %arg13[%c0_136, %c112] : memref<9x128xf32, #tpu.memory_space<vmem>>, vector<1x16xf32>
    tpu.vector_store %arg13[%c0_136, %c112], %157 {strides = array<i32>} : memref<9x128xf32, #tpu.memory_space<vmem>>, vector<1x16xf32>,
    %159 = vector.extract_strided_slice %142 {offsets = [0, 16], sizes = [1, 16], strides = [1, 1]} : vector<24x48xf32> to vector<1x16xf32>
    %c1_137 = arith.constant 1 : index
    %c0_138 = arith.constant 0 : index
    %160 = vector.load %arg13[%c1_137, %c0_138] : memref<9x128xf32, #tpu.memory_space<vmem>>, vector<1x16xf32>
    tpu.vector_store %arg13[%c1_137, %c0_138], %159 {strides = array<i32>} : memref<9x128xf32, #tpu.memory_space<vmem>>, vector<1x16xf32>,
    %161 = vector.extract_strided_slice %142 {offsets = [1, 16], sizes = [1, 16], strides = [1, 1]} : vector<24x48xf32> to vector<1x16xf32>
    %c1_139 = arith.constant 1 : index
    %c16_140 = arith.constant 16 : index
    %162 = vector.load %arg13[%c1_139, %c16_140] : memref<9x128xf32, #tpu.memory_space<vmem>>, vector<1x16xf32>
    tpu.vector_store %arg13[%c1_139, %c16_140], %161 {strides = array<i32>} : memref<9x128xf32, #tpu.memory_space<vmem>>, vector<1x16xf32>,
    %163 = vector.extract_strided_slice %142 {offsets = [2, 16], sizes = [1, 16], strides = [1, 1]} : vector<24x48xf32> to vector<1x16xf32>
    %c1_141 = arith.constant 1 : index
    %c32_142 = arith.constant 32 : index
    %164 = vector.load %arg13[%c1_141, %c32_142] : memref<9x128xf32, #tpu.memory_space<vmem>>, vector<1x16xf32>
    tpu.vector_store %arg13[%c1_141, %c32_142], %163 {strides = array<i32>} : memref<9x128xf32, #tpu.memory_space<vmem>>, vector<1x16xf32>,
    %165 = vector.extract_strided_slice %142 {offsets = [3, 16], sizes = [1, 16], strides = [1, 1]} : vector<24x48xf32> to vector<1x16xf32>
    %c1_143 = arith.constant 1 : index
    %c48_144 = arith.constant 48 : index
    %166 = vector.load %arg13[%c1_143, %c48_144] : memref<9x128xf32, #tpu.memory_space<vmem>>, vector<1x16xf32>
    tpu.vector_store %arg13[%c1_143, %c48_144], %165 {strides = array<i32>} : memref<9x128xf32, #tpu.memory_space<vmem>>, vector<1x16xf32>,
    %167 = vector.extract_strided_slice %142 {offsets = [4, 16], sizes = [1, 16], strides = [1, 1]} : vector<24x48xf32> to vector<1x16xf32>
    %c1_145 = arith.constant 1 : index
    %c64_146 = arith.constant 64 : index
    %168 = vector.load %arg13[%c1_145, %c64_146] : memref<9x128xf32, #tpu.memory_space<vmem>>, vector<1x16xf32>
    tpu.vector_store %arg13[%c1_145, %c64_146], %167 {strides = array<i32>} : memref<9x128xf32, #tpu.memory_space<vmem>>, vector<1x16xf32>,
    %169 = vector.extract_strided_slice %142 {offsets = [5, 16], sizes = [1, 16], strides = [1, 1]} : vector<24x48xf32> to vector<1x16xf32>
    %c1_147 = arith.constant 1 : index
    %c80_148 = arith.constant 80 : index
    %170 = vector.load %arg13[%c1_147, %c80_148] : memref<9x128xf32, #tpu.memory_space<vmem>>, vector<1x16xf32>
    tpu.vector_store %arg13[%c1_147, %c80_148], %169 {strides = array<i32>} : memref<9x128xf32, #tpu.memory_space<vmem>>, vector<1x16xf32>,
    %171 = vector.extract_strided_slice %142 {offsets = [6, 16], sizes = [1, 16], strides = [1, 1]} : vector<24x48xf32> to vector<1x16xf32>
    %c1_149 = arith.constant 1 : index
    %c96_150 = arith.constant 96 : index
    %172 = vector.load %arg13[%c1_149, %c96_150] : memref<9x128xf32, #tpu.memory_space<vmem>>, vector<1x16xf32>
    tpu.vector_store %arg13[%c1_149, %c96_150], %171 {strides = array<i32>} : memref<9x128xf32, #tpu.memory_space<vmem>>, vector<1x16xf32>,
    %173 = vector.extract_strided_slice %142 {offsets = [7, 16], sizes = [1, 16], strides = [1, 1]} : vector<24x48xf32> to vector<1x16xf32>
    %c1_151 = arith.constant 1 : index
    %c112_152 = arith.constant 112 : index
    %174 = vector.load %arg13[%c1_151, %c112_152] : memref<9x128xf32, #tpu.memory_space<vmem>>, vector<1x16xf32>
    tpu.vector_store %arg13[%c1_151, %c112_152], %173 {strides = array<i32>} : memref<9x128xf32, #tpu.memory_space<vmem>>, vector<1x16xf32>,
    %175 = vector.extract_strided_slice %142 {offsets = [0, 32], sizes = [1, 16], strides = [1, 1]} : vector<24x48xf32> to vector<1x16xf32>
    %c2_153 = arith.constant 2 : index
    %c0_154 = arith.constant 0 : index
    %176 = vector.load %arg13[%c2_153, %c0_154] : memref<9x128xf32, #tpu.memory_space<vmem>>, vector<1x16xf32>
    tpu.vector_store %arg13[%c2_153, %c0_154], %175 {strides = array<i32>} : memref<9x128xf32, #tpu.memory_space<vmem>>, vector<1x16xf32>,
    %177 = vector.extract_strided_slice %142 {offsets = [1, 32], sizes = [1, 16], strides = [1, 1]} : vector<24x48xf32> to vector<1x16xf32>
    %c2_155 = arith.constant 2 : index
    %c16_156 = arith.constant 16 : index
    %178 = vector.load %arg13[%c2_155, %c16_156] : memref<9x128xf32, #tpu.memory_space<vmem>>, vector<1x16xf32>
    tpu.vector_store %arg13[%c2_155, %c16_156], %177 {strides = array<i32>} : memref<9x128xf32, #tpu.memory_space<vmem>>, vector<1x16xf32>,
    %179 = vector.extract_strided_slice %142 {offsets = [2, 32], sizes = [1, 16], strides = [1, 1]} : vector<24x48xf32> to vector<1x16xf32>
    %c2_157 = arith.constant 2 : index
    %c32_158 = arith.constant 32 : index
    %180 = vector.load %arg13[%c2_157, %c32_158] : memref<9x128xf32, #tpu.memory_space<vmem>>, vector<1x16xf32>
    tpu.vector_store %arg13[%c2_157, %c32_158], %179 {strides = array<i32>} : memref<9x128xf32, #tpu.memory_space<vmem>>, vector<1x16xf32>,
    %181 = vector.extract_strided_slice %142 {offsets = [3, 32], sizes = [1, 16], strides = [1, 1]} : vector<24x48xf32> to vector<1x16xf32>
    %c2_159 = arith.constant 2 : index
    %c48_160 = arith.constant 48 : index
    %182 = vector.load %arg13[%c2_159, %c48_160] : memref<9x128xf32, #tpu.memory_space<vmem>>, vector<1x16xf32>
    tpu.vector_store %arg13[%c2_159, %c48_160], %181 {strides = array<i32>} : memref<9x128xf32, #tpu.memory_space<vmem>>, vector<1x16xf32>,
    %183 = vector.extract_strided_slice %142 {offsets = [4, 32], sizes = [1, 16], strides = [1, 1]} : vector<24x48xf32> to vector<1x16xf32>
    %c2_161 = arith.constant 2 : index
    %c64_162 = arith.constant 64 : index
    %184 = vector.load %arg13[%c2_161, %c64_162] : memref<9x128xf32, #tpu.memory_space<vmem>>, vector<1x16xf32>
    tpu.vector_store %arg13[%c2_161, %c64_162], %183 {strides = array<i32>} : memref<9x128xf32, #tpu.memory_space<vmem>>, vector<1x16xf32>,
    %185 = vector.extract_strided_slice %142 {offsets = [5, 32], sizes = [1, 16], strides = [1, 1]} : vector<24x48xf32> to vector<1x16xf32>
    %c2_163 = arith.constant 2 : index
    %c80_164 = arith.constant 80 : index
    %186 = vector.load %arg13[%c2_163, %c80_164] : memref<9x128xf32, #tpu.memory_space<vmem>>, vector<1x16xf32>
    tpu.vector_store %arg13[%c2_163, %c80_164], %185 {strides = array<i32>} : memref<9x128xf32, #tpu.memory_space<vmem>>, vector<1x16xf32>,
    %187 = vector.extract_strided_slice %142 {offsets = [6, 32], sizes = [1, 16], strides = [1, 1]} : vector<24x48xf32> to vector<1x16xf32>
    %c2_165 = arith.constant 2 : index
    %c96_166 = arith.constant 96 : index
    %188 = vector.load %arg13[%c2_165, %c96_166] : memref<9x128xf32, #tpu.memory_space<vmem>>, vector<1x16xf32>
    tpu.vector_store %arg13[%c2_165, %c96_166], %187 {strides = array<i32>} : memref<9x128xf32, #tpu.memory_space<vmem>>, vector<1x16xf32>,
    %189 = vector.extract_strided_slice %142 {offsets = [7, 32], sizes = [1, 16], strides = [1, 1]} : vector<24x48xf32> to vector<1x16xf32>
    %c2_167 = arith.constant 2 : index
    %c112_168 = arith.constant 112 : index
    %190 = vector.load %arg13[%c2_167, %c112_168] : memref<9x128xf32, #tpu.memory_space<vmem>>, vector<1x16xf32>
    tpu.vector_store %arg13[%c2_167, %c112_168], %189 {strides = array<i32>} : memref<9x128xf32, #tpu.memory_space<vmem>>, vector<1x16xf32>,
    %191 = vector.extract_strided_slice %142 {offsets = [8, 0], sizes = [1, 16], strides = [1, 1]} : vector<24x48xf32> to vector<1x16xf32>
    %c3_169 = arith.constant 3 : index
    %c0_170 = arith.constant 0 : index
    %192 = vector.load %arg13[%c3_169, %c0_170] : memref<9x128xf32, #tpu.memory_space<vmem>>, vector<1x16xf32>
    tpu.vector_store %arg13[%c3_169, %c0_170], %191 {strides = array<i32>} : memref<9x128xf32, #tpu.memory_space<vmem>>, vector<1x16xf32>,
    %193 = vector.extract_strided_slice %142 {offsets = [9, 0], sizes = [1, 16], strides = [1, 1]} : vector<24x48xf32> to vector<1x16xf32>
    %c3_171 = arith.constant 3 : index
    %c16_172 = arith.constant 16 : index
    %194 = vector.load %arg13[%c3_171, %c16_172] : memref<9x128xf32, #tpu.memory_space<vmem>>, vector<1x16xf32>
    tpu.vector_store %arg13[%c3_171, %c16_172], %193 {strides = array<i32>} : memref<9x128xf32, #tpu.memory_space<vmem>>, vector<1x16xf32>,
    %195 = vector.extract_strided_slice %142 {offsets = [10, 0], sizes = [1, 16], strides = [1, 1]} : vector<24x48xf32> to vector<1x16xf32>
    %c3_173 = arith.constant 3 : index
    %c32_174 = arith.constant 32 : index
    %196 = vector.load %arg13[%c3_173, %c32_174] : memref<9x128xf32, #tpu.memory_space<vmem>>, vector<1x16xf32>
    tpu.vector_store %arg13[%c3_173, %c32_174], %195 {strides = array<i32>} : memref<9x128xf32, #tpu.memory_space<vmem>>, vector<1x16xf32>,
    %197 = vector.extract_strided_slice %142 {offsets = [11, 0], sizes = [1, 16], strides = [1, 1]} : vector<24x48xf32> to vector<1x16xf32>
    %c3_175 = arith.constant 3 : index
    %c48_176 = arith.constant 48 : index
    %198 = vector.load %arg13[%c3_175, %c48_176] : memref<9x128xf32, #tpu.memory_space<vmem>>, vector<1x16xf32>
    tpu.vector_store %arg13[%c3_175, %c48_176], %197 {strides = array<i32>} : memref<9x128xf32, #tpu.memory_space<vmem>>, vector<1x16xf32>,
    %199 = vector.extract_strided_slice %142 {offsets = [12, 0], sizes = [1, 16], strides = [1, 1]} : vector<24x48xf32> to vector<1x16xf32>
    %c3_177 = arith.constant 3 : index
    %c64_178 = arith.constant 64 : index
    %200 = vector.load %arg13[%c3_177, %c64_178] : memref<9x128xf32, #tpu.memory_space<vmem>>, vector<1x16xf32>
    tpu.vector_store %arg13[%c3_177, %c64_178], %199 {strides = array<i32>} : memref<9x128xf32, #tpu.memory_space<vmem>>, vector<1x16xf32>,
    %201 = vector.extract_strided_slice %142 {offsets = [13, 0], sizes = [1, 16], strides = [1, 1]} : vector<24x48xf32> to vector<1x16xf32>
    %c3_179 = arith.constant 3 : index
    %c80_180 = arith.constant 80 : index
    %202 = vector.load %arg13[%c3_179, %c80_180] : memref<9x128xf32, #tpu.memory_space<vmem>>, vector<1x16xf32>
    tpu.vector_store %arg13[%c3_179, %c80_180], %201 {strides = array<i32>} : memref<9x128xf32, #tpu.memory_space<vmem>>, vector<1x16xf32>,
    %203 = vector.extract_strided_slice %142 {offsets = [14, 0], sizes = [1, 16], strides = [1, 1]} : vector<24x48xf32> to vector<1x16xf32>
    %c3_181 = arith.constant 3 : index
    %c96_182 = arith.constant 96 : index
    %204 = vector.load %arg13[%c3_181, %c96_182] : memref<9x128xf32, #tpu.memory_space<vmem>>, vector<1x16xf32>
    tpu.vector_store %arg13[%c3_181, %c96_182], %203 {strides = array<i32>} : memref<9x128xf32, #tpu.memory_space<vmem>>, vector<1x16xf32>,
    %205 = vector.extract_strided_slice %142 {offsets = [15, 0], sizes = [1, 16], strides = [1, 1]} : vector<24x48xf32> to vector<1x16xf32>
    %c3_183 = arith.constant 3 : index
    %c112_184 = arith.constant 112 : index
    %206 = vector.load %arg13[%c3_183, %c112_184] : memref<9x128xf32, #tpu.memory_space<vmem>>, vector<1x16xf32>
    tpu.vector_store %arg13[%c3_183, %c112_184], %205 {strides = array<i32>} : memref<9x128xf32, #tpu.memory_space<vmem>>, vector<1x16xf32>,
    %207 = vector.extract_strided_slice %142 {offsets = [8, 16], sizes = [1, 16], strides = [1, 1]} : vector<24x48xf32> to vector<1x16xf32>
    %c4_185 = arith.constant 4 : index
    %c0_186 = arith.constant 0 : index
    %208 = vector.load %arg13[%c4_185, %c0_186] : memref<9x128xf32, #tpu.memory_space<vmem>>, vector<1x16xf32>
    tpu.vector_store %arg13[%c4_185, %c0_186], %207 {strides = array<i32>} : memref<9x128xf32, #tpu.memory_space<vmem>>, vector<1x16xf32>,
    %209 = vector.extract_strided_slice %142 {offsets = [9, 16], sizes = [1, 16], strides = [1, 1]} : vector<24x48xf32> to vector<1x16xf32>
    %c4_187 = arith.constant 4 : index
    %c16_188 = arith.constant 16 : index
    %210 = vector.load %arg13[%c4_187, %c16_188] : memref<9x128xf32, #tpu.memory_space<vmem>>, vector<1x16xf32>
    tpu.vector_store %arg13[%c4_187, %c16_188], %209 {strides = array<i32>} : memref<9x128xf32, #tpu.memory_space<vmem>>, vector<1x16xf32>,
    %211 = vector.extract_strided_slice %142 {offsets = [10, 16], sizes = [1, 16], strides = [1, 1]} : vector<24x48xf32> to vector<1x16xf32>
    %c4_189 = arith.constant 4 : index
    %c32_190 = arith.constant 32 : index
    %212 = vector.load %arg13[%c4_189, %c32_190] : memref<9x128xf32, #tpu.memory_space<vmem>>, vector<1x16xf32>
    tpu.vector_store %arg13[%c4_189, %c32_190], %211 {strides = array<i32>} : memref<9x128xf32, #tpu.memory_space<vmem>>, vector<1x16xf32>,
    %213 = vector.extract_strided_slice %142 {offsets = [11, 16], sizes = [1, 16], strides = [1, 1]} : vector<24x48xf32> to vector<1x16xf32>
    %c4_191 = arith.constant 4 : index
    %c48_192 = arith.constant 48 : index
    %214 = vector.load %arg13[%c4_191, %c48_192] : memref<9x128xf32, #tpu.memory_space<vmem>>, vector<1x16xf32>
    tpu.vector_store %arg13[%c4_191, %c48_192], %213 {strides = array<i32>} : memref<9x128xf32, #tpu.memory_space<vmem>>, vector<1x16xf32>,
    %215 = vector.extract_strided_slice %142 {offsets = [12, 16], sizes = [1, 16], strides = [1, 1]} : vector<24x48xf32> to vector<1x16xf32>
    %c4_193 = arith.constant 4 : index
    %c64_194 = arith.constant 64 : index
    %216 = vector.load %arg13[%c4_193, %c64_194] : memref<9x128xf32, #tpu.memory_space<vmem>>, vector<1x16xf32>
    tpu.vector_store %arg13[%c4_193, %c64_194], %215 {strides = array<i32>} : memref<9x128xf32, #tpu.memory_space<vmem>>, vector<1x16xf32>,
    %217 = vector.extract_strided_slice %142 {offsets = [13, 16], sizes = [1, 16], strides = [1, 1]} : vector<24x48xf32> to vector<1x16xf32>
    %c4_195 = arith.constant 4 : index
    %c80_196 = arith.constant 80 : index
    %218 = vector.load %arg13[%c4_195, %c80_196] : memref<9x128xf32, #tpu.memory_space<vmem>>, vector<1x16xf32>
    tpu.vector_store %arg13[%c4_195, %c80_196], %217 {strides = array<i32>} : memref<9x128xf32, #tpu.memory_space<vmem>>, vector<1x16xf32>,
    %219 = vector.extract_strided_slice %142 {offsets = [14, 16], sizes = [1, 16], strides = [1, 1]} : vector<24x48xf32> to vector<1x16xf32>
    %c4_197 = arith.constant 4 : index
    %c96_198 = arith.constant 96 : index
    %220 = vector.load %arg13[%c4_197, %c96_198] : memref<9x128xf32, #tpu.memory_space<vmem>>, vector<1x16xf32>
    tpu.vector_store %arg13[%c4_197, %c96_198], %219 {strides = array<i32>} : memref<9x128xf32, #tpu.memory_space<vmem>>, vector<1x16xf32>,
    %221 = vector.extract_strided_slice %142 {offsets = [15, 16], sizes = [1, 16], strides = [1, 1]} : vector<24x48xf32> to vector<1x16xf32>
    %c4_199 = arith.constant 4 : index
    %c112_200 = arith.constant 112 : index
    %222 = vector.load %arg13[%c4_199, %c112_200] : memref<9x128xf32, #tpu.memory_space<vmem>>, vector<1x16xf32>
    tpu.vector_store %arg13[%c4_199, %c112_200], %221 {strides = array<i32>} : memref<9x128xf32, #tpu.memory_space<vmem>>, vector<1x16xf32>,
    %223 = vector.extract_strided_slice %142 {offsets = [8, 32], sizes = [1, 16], strides = [1, 1]} : vector<24x48xf32> to vector<1x16xf32>
    %c5_201 = arith.constant 5 : index
    %c0_202 = arith.constant 0 : index
    %224 = vector.load %arg13[%c5_201, %c0_202] : memref<9x128xf32, #tpu.memory_space<vmem>>, vector<1x16xf32>
    tpu.vector_store %arg13[%c5_201, %c0_202], %223 {strides = array<i32>} : memref<9x128xf32, #tpu.memory_space<vmem>>, vector<1x16xf32>,
    %225 = vector.extract_strided_slice %142 {offsets = [9, 32], sizes = [1, 16], strides = [1, 1]} : vector<24x48xf32> to vector<1x16xf32>
    %c5_203 = arith.constant 5 : index
    %c16_204 = arith.constant 16 : index
    %226 = vector.load %arg13[%c5_203, %c16_204] : memref<9x128xf32, #tpu.memory_space<vmem>>, vector<1x16xf32>
    tpu.vector_store %arg13[%c5_203, %c16_204], %225 {strides = array<i32>} : memref<9x128xf32, #tpu.memory_space<vmem>>, vector<1x16xf32>,
    %227 = vector.extract_strided_slice %142 {offsets = [10, 32], sizes = [1, 16], strides = [1, 1]} : vector<24x48xf32> to vector<1x16xf32>
    %c5_205 = arith.constant 5 : index
    %c32_206 = arith.constant 32 : index
    %228 = vector.load %arg13[%c5_205, %c32_206] : memref<9x128xf32, #tpu.memory_space<vmem>>, vector<1x16xf32>
    tpu.vector_store %arg13[%c5_205, %c32_206], %227 {strides = array<i32>} : memref<9x128xf32, #tpu.memory_space<vmem>>, vector<1x16xf32>,
    %229 = vector.extract_strided_slice %142 {offsets = [11, 32], sizes = [1, 16], strides = [1, 1]} : vector<24x48xf32> to vector<1x16xf32>
    %c5_207 = arith.constant 5 : index
    %c48_208 = arith.constant 48 : index
    %230 = vector.load %arg13[%c5_207, %c48_208] : memref<9x128xf32, #tpu.memory_space<vmem>>, vector<1x16xf32>
    tpu.vector_store %arg13[%c5_207, %c48_208], %229 {strides = array<i32>} : memref<9x128xf32, #tpu.memory_space<vmem>>, vector<1x16xf32>,
    %231 = vector.extract_strided_slice %142 {offsets = [12, 32], sizes = [1, 16], strides = [1, 1]} : vector<24x48xf32> to vector<1x16xf32>
    %c5_209 = arith.constant 5 : index
    %c64_210 = arith.constant 64 : index
    %232 = vector.load %arg13[%c5_209, %c64_210] : memref<9x128xf32, #tpu.memory_space<vmem>>, vector<1x16xf32>
    tpu.vector_store %arg13[%c5_209, %c64_210], %231 {strides = array<i32>} : memref<9x128xf32, #tpu.memory_space<vmem>>, vector<1x16xf32>,
    %233 = vector.extract_strided_slice %142 {offsets = [13, 32], sizes = [1, 16], strides = [1, 1]} : vector<24x48xf32> to vector<1x16xf32>
    %c5_211 = arith.constant 5 : index
    %c80_212 = arith.constant 80 : index
    %234 = vector.load %arg13[%c5_211, %c80_212] : memref<9x128xf32, #tpu.memory_space<vmem>>, vector<1x16xf32>
    tpu.vector_store %arg13[%c5_211, %c80_212], %233 {strides = array<i32>} : memref<9x128xf32, #tpu.memory_space<vmem>>, vector<1x16xf32>,
    %235 = vector.extract_strided_slice %142 {offsets = [14, 32], sizes = [1, 16], strides = [1, 1]} : vector<24x48xf32> to vector<1x16xf32>
    %c5_213 = arith.constant 5 : index
    %c96_214 = arith.constant 96 : index
    %236 = vector.load %arg13[%c5_213, %c96_214] : memref<9x128xf32, #tpu.memory_space<vmem>>, vector<1x16xf32>
    tpu.vector_store %arg13[%c5_213, %c96_214], %235 {strides = array<i32>} : memref<9x128xf32, #tpu.memory_space<vmem>>, vector<1x16xf32>,
    %237 = vector.extract_strided_slice %142 {offsets = [15, 32], sizes = [1, 16], strides = [1, 1]} : vector<24x48xf32> to vector<1x16xf32>
    %c5_215 = arith.constant 5 : index
    %c112_216 = arith.constant 112 : index
    %238 = vector.load %arg13[%c5_215, %c112_216] : memref<9x128xf32, #tpu.memory_space<vmem>>, vector<1x16xf32>
    tpu.vector_store %arg13[%c5_215, %c112_216], %237 {strides = array<i32>} : memref<9x128xf32, #tpu.memory_space<vmem>>, vector<1x16xf32>,
    %239 = vector.extract_strided_slice %142 {offsets = [16, 0], sizes = [1, 16], strides = [1, 1]} : vector<24x48xf32> to vector<1x16xf32>
    %c6_217 = arith.constant 6 : index
    %c0_218 = arith.constant 0 : index
    %240 = vector.load %arg13[%c6_217, %c0_218] : memref<9x128xf32, #tpu.memory_space<vmem>>, vector<1x16xf32>
    tpu.vector_store %arg13[%c6_217, %c0_218], %239 {strides = array<i32>} : memref<9x128xf32, #tpu.memory_space<vmem>>, vector<1x16xf32>,
    %241 = vector.extract_strided_slice %142 {offsets = [17, 0], sizes = [1, 16], strides = [1, 1]} : vector<24x48xf32> to vector<1x16xf32>
    %c6_219 = arith.constant 6 : index
    %c16_220 = arith.constant 16 : index
    %242 = vector.load %arg13[%c6_219, %c16_220] : memref<9x128xf32, #tpu.memory_space<vmem>>, vector<1x16xf32>
    tpu.vector_store %arg13[%c6_219, %c16_220], %241 {strides = array<i32>} : memref<9x128xf32, #tpu.memory_space<vmem>>, vector<1x16xf32>,
    %243 = vector.extract_strided_slice %142 {offsets = [18, 0], sizes = [1, 16], strides = [1, 1]} : vector<24x48xf32> to vector<1x16xf32>
    %c6_221 = arith.constant 6 : index
    %c32_222 = arith.constant 32 : index
    %244 = vector.load %arg13[%c6_221, %c32_222] : memref<9x128xf32, #tpu.memory_space<vmem>>, vector<1x16xf32>
    tpu.vector_store %arg13[%c6_221, %c32_222], %243 {strides = array<i32>} : memref<9x128xf32, #tpu.memory_space<vmem>>, vector<1x16xf32>,
    %245 = vector.extract_strided_slice %142 {offsets = [19, 0], sizes = [1, 16], strides = [1, 1]} : vector<24x48xf32> to vector<1x16xf32>
    %c6_223 = arith.constant 6 : index
    %c48_224 = arith.constant 48 : index
    %246 = vector.load %arg13[%c6_223, %c48_224] : memref<9x128xf32, #tpu.memory_space<vmem>>, vector<1x16xf32>
    tpu.vector_store %arg13[%c6_223, %c48_224], %245 {strides = array<i32>} : memref<9x128xf32, #tpu.memory_space<vmem>>, vector<1x16xf32>,
    %247 = vector.extract_strided_slice %142 {offsets = [20, 0], sizes = [1, 16], strides = [1, 1]} : vector<24x48xf32> to vector<1x16xf32>
    %c6_225 = arith.constant 6 : index
    %c64_226 = arith.constant 64 : index
    %248 = vector.load %arg13[%c6_225, %c64_226] : memref<9x128xf32, #tpu.memory_space<vmem>>, vector<1x16xf32>
    tpu.vector_store %arg13[%c6_225, %c64_226], %247 {strides = array<i32>} : memref<9x128xf32, #tpu.memory_space<vmem>>, vector<1x16xf32>,
    %249 = vector.extract_strided_slice %142 {offsets = [21, 0], sizes = [1, 16], strides = [1, 1]} : vector<24x48xf32> to vector<1x16xf32>
    %c6_227 = arith.constant 6 : index
    %c80_228 = arith.constant 80 : index
    %250 = vector.load %arg13[%c6_227, %c80_228] : memref<9x128xf32, #tpu.memory_space<vmem>>, vector<1x16xf32>
    tpu.vector_store %arg13[%c6_227, %c80_228], %249 {strides = array<i32>} : memref<9x128xf32, #tpu.memory_space<vmem>>, vector<1x16xf32>,
    %251 = vector.extract_strided_slice %142 {offsets = [22, 0], sizes = [1, 16], strides = [1, 1]} : vector<24x48xf32> to vector<1x16xf32>
    %c6_229 = arith.constant 6 : index
    %c96_230 = arith.constant 96 : index
    %252 = vector.load %arg13[%c6_229, %c96_230] : memref<9x128xf32, #tpu.memory_space<vmem>>, vector<1x16xf32>
    tpu.vector_store %arg13[%c6_229, %c96_230], %251 {strides = array<i32>} : memref<9x128xf32, #tpu.memory_space<vmem>>, vector<1x16xf32>,
    %253 = vector.extract_strided_slice %142 {offsets = [23, 0], sizes = [1, 16], strides = [1, 1]} : vector<24x48xf32> to vector<1x16xf32>
    %c6_231 = arith.constant 6 : index
    %c112_232 = arith.constant 112 : index
    %254 = vector.load %arg13[%c6_231, %c112_232] : memref<9x128xf32, #tpu.memory_space<vmem>>, vector<1x16xf32>
    tpu.vector_store %arg13[%c6_231, %c112_232], %253 {strides = array<i32>} : memref<9x128xf32, #tpu.memory_space<vmem>>, vector<1x16xf32>,
    %255 = vector.extract_strided_slice %142 {offsets = [16, 16], sizes = [1, 16], strides = [1, 1]} : vector<24x48xf32> to vector<1x16xf32>
    %c7_233 = arith.constant 7 : index
    %c0_234 = arith.constant 0 : index
    %256 = vector.load %arg13[%c7_233, %c0_234] : memref<9x128xf32, #tpu.memory_space<vmem>>, vector<1x16xf32>
    tpu.vector_store %arg13[%c7_233, %c0_234], %255 {strides = array<i32>} : memref<9x128xf32, #tpu.memory_space<vmem>>, vector<1x16xf32>,
    %257 = vector.extract_strided_slice %142 {offsets = [17, 16], sizes = [1, 16], strides = [1, 1]} : vector<24x48xf32> to vector<1x16xf32>
    %c7_235 = arith.constant 7 : index
    %c16_236 = arith.constant 16 : index
    %258 = vector.load %arg13[%c7_235, %c16_236] : memref<9x128xf32, #tpu.memory_space<vmem>>, vector<1x16xf32>
    tpu.vector_store %arg13[%c7_235, %c16_236], %257 {strides = array<i32>} : memref<9x128xf32, #tpu.memory_space<vmem>>, vector<1x16xf32>,
    %259 = vector.extract_strided_slice %142 {offsets = [18, 16], sizes = [1, 16], strides = [1, 1]} : vector<24x48xf32> to vector<1x16xf32>
    %c7_237 = arith.constant 7 : index
    %c32_238 = arith.constant 32 : index
    %260 = vector.load %arg13[%c7_237, %c32_238] : memref<9x128xf32, #tpu.memory_space<vmem>>, vector<1x16xf32>
    tpu.vector_store %arg13[%c7_237, %c32_238], %259 {strides = array<i32>} : memref<9x128xf32, #tpu.memory_space<vmem>>, vector<1x16xf32>,
    %261 = vector.extract_strided_slice %142 {offsets = [19, 16], sizes = [1, 16], strides = [1, 1]} : vector<24x48xf32> to vector<1x16xf32>
    %c7_239 = arith.constant 7 : index
    %c48_240 = arith.constant 48 : index
    %262 = vector.load %arg13[%c7_239, %c48_240] : memref<9x128xf32, #tpu.memory_space<vmem>>, vector<1x16xf32>
    tpu.vector_store %arg13[%c7_239, %c48_240], %261 {strides = array<i32>} : memref<9x128xf32, #tpu.memory_space<vmem>>, vector<1x16xf32>,
    %263 = vector.extract_strided_slice %142 {offsets = [20, 16], sizes = [1, 16], strides = [1, 1]} : vector<24x48xf32> to vector<1x16xf32>
    %c7_241 = arith.constant 7 : index
    %c64_242 = arith.constant 64 : index
    %264 = vector.load %arg13[%c7_241, %c64_242] : memref<9x128xf32, #tpu.memory_space<vmem>>, vector<1x16xf32>
    tpu.vector_store %arg13[%c7_241, %c64_242], %263 {strides = array<i32>} : memref<9x128xf32, #tpu.memory_space<vmem>>, vector<1x16xf32>,
    %265 = vector.extract_strided_slice %142 {offsets = [21, 16], sizes = [1, 16], strides = [1, 1]} : vector<24x48xf32> to vector<1x16xf32>
    %c7_243 = arith.constant 7 : index
    %c80_244 = arith.constant 80 : index
    %266 = vector.load %arg13[%c7_243, %c80_244] : memref<9x128xf32, #tpu.memory_space<vmem>>, vector<1x16xf32>
    tpu.vector_store %arg13[%c7_243, %c80_244], %265 {strides = array<i32>} : memref<9x128xf32, #tpu.memory_space<vmem>>, vector<1x16xf32>,
    %267 = vector.extract_strided_slice %142 {offsets = [22, 16], sizes = [1, 16], strides = [1, 1]} : vector<24x48xf32> to vector<1x16xf32>
    %c7_245 = arith.constant 7 : index
    %c96_246 = arith.constant 96 : index
    %268 = vector.load %arg13[%c7_245, %c96_246] : memref<9x128xf32, #tpu.memory_space<vmem>>, vector<1x16xf32>
    tpu.vector_store %arg13[%c7_245, %c96_246], %267 {strides = array<i32>} : memref<9x128xf32, #tpu.memory_space<vmem>>, vector<1x16xf32>,
    %269 = vector.extract_strided_slice %142 {offsets = [23, 16], sizes = [1, 16], strides = [1, 1]} : vector<24x48xf32> to vector<1x16xf32>
    %c7_247 = arith.constant 7 : index
    %c112_248 = arith.constant 112 : index
    %270 = vector.load %arg13[%c7_247, %c112_248] : memref<9x128xf32, #tpu.memory_space<vmem>>, vector<1x16xf32>
    tpu.vector_store %arg13[%c7_247, %c112_248], %269 {strides = array<i32>} : memref<9x128xf32, #tpu.memory_space<vmem>>, vector<1x16xf32>,
    %271 = vector.extract_strided_slice %142 {offsets = [16, 32], sizes = [1, 16], strides = [1, 1]} : vector<24x48xf32> to vector<1x16xf32>
    %c8_249 = arith.constant 8 : index
    %c0_250 = arith.constant 0 : index
    %272 = vector.load %arg13[%c8_249, %c0_250] : memref<9x128xf32, #tpu.memory_space<vmem>>, vector<1x16xf32>
    tpu.vector_store %arg13[%c8_249, %c0_250], %271 {strides = array<i32>} : memref<9x128xf32, #tpu.memory_space<vmem>>, vector<1x16xf32>,
    %273 = vector.extract_strided_slice %142 {offsets = [17, 32], sizes = [1, 16], strides = [1, 1]} : vector<24x48xf32> to vector<1x16xf32>
    %c8_251 = arith.constant 8 : index
    %c16_252 = arith.constant 16 : index
    %274 = vector.load %arg13[%c8_251, %c16_252] : memref<9x128xf32, #tpu.memory_space<vmem>>, vector<1x16xf32>
    tpu.vector_store %arg13[%c8_251, %c16_252], %273 {strides = array<i32>} : memref<9x128xf32, #tpu.memory_space<vmem>>, vector<1x16xf32>,
    %275 = vector.extract_strided_slice %142 {offsets = [18, 32], sizes = [1, 16], strides = [1, 1]} : vector<24x48xf32> to vector<1x16xf32>
    %c8_253 = arith.constant 8 : index
    %c32_254 = arith.constant 32 : index
    %276 = vector.load %arg13[%c8_253, %c32_254] : memref<9x128xf32, #tpu.memory_space<vmem>>, vector<1x16xf32>
    tpu.vector_store %arg13[%c8_253, %c32_254], %275 {strides = array<i32>} : memref<9x128xf32, #tpu.memory_space<vmem>>, vector<1x16xf32>,
    %277 = vector.extract_strided_slice %142 {offsets = [19, 32], sizes = [1, 16], strides = [1, 1]} : vector<24x48xf32> to vector<1x16xf32>
    %c8_255 = arith.constant 8 : index
    %c48_256 = arith.constant 48 : index
    %278 = vector.load %arg13[%c8_255, %c48_256] : memref<9x128xf32, #tpu.memory_space<vmem>>, vector<1x16xf32>
    tpu.vector_store %arg13[%c8_255, %c48_256], %277 {strides = array<i32>} : memref<9x128xf32, #tpu.memory_space<vmem>>, vector<1x16xf32>,
    %279 = vector.extract_strided_slice %142 {offsets = [20, 32], sizes = [1, 16], strides = [1, 1]} : vector<24x48xf32> to vector<1x16xf32>
    %c8_257 = arith.constant 8 : index
    %c64_258 = arith.constant 64 : index
    %280 = vector.load %arg13[%c8_257, %c64_258] : memref<9x128xf32, #tpu.memory_space<vmem>>, vector<1x16xf32>
    tpu.vector_store %arg13[%c8_257, %c64_258], %279 {strides = array<i32>} : memref<9x128xf32, #tpu.memory_space<vmem>>, vector<1x16xf32>,
    %281 = vector.extract_strided_slice %142 {offsets = [21, 32], sizes = [1, 16], strides = [1, 1]} : vector<24x48xf32> to vector<1x16xf32>
    %c8_259 = arith.constant 8 : index
    %c80_260 = arith.constant 80 : index
    %282 = vector.load %arg13[%c8_259, %c80_260] : memref<9x128xf32, #tpu.memory_space<vmem>>, vector<1x16xf32>
    tpu.vector_store %arg13[%c8_259, %c80_260], %281 {strides = array<i32>} : memref<9x128xf32, #tpu.memory_space<vmem>>, vector<1x16xf32>,
    %283 = vector.extract_strided_slice %142 {offsets = [22, 32], sizes = [1, 16], strides = [1, 1]} : vector<24x48xf32> to vector<1x16xf32>
    %c8_261 = arith.constant 8 : index
    %c96_262 = arith.constant 96 : index
    %284 = vector.load %arg13[%c8_261, %c96_262] : memref<9x128xf32, #tpu.memory_space<vmem>>, vector<1x16xf32>
    tpu.vector_store %arg13[%c8_261, %c96_262], %283 {strides = array<i32>} : memref<9x128xf32, #tpu.memory_space<vmem>>, vector<1x16xf32>,
    %285 = vector.extract_strided_slice %142 {offsets = [23, 32], sizes = [1, 16], strides = [1, 1]} : vector<24x48xf32> to vector<1x16xf32>
    %c8_263 = arith.constant 8 : index
    %c112_264 = arith.constant 112 : index
    %286 = vector.load %arg13[%c8_263, %c112_264] : memref<9x128xf32, #tpu.memory_space<vmem>>, vector<1x16xf32>
    tpu.vector_store %arg13[%c8_263, %c112_264], %285 {strides = array<i32>} : memref<9x128xf32, #tpu.memory_space<vmem>>, vector<1x16xf32>,
    %c0_265 = arith.constant 0 : index
    %c0_266 = arith.constant 0 : index
    %287 = vector.load %arg13[%c0_265, %c0_266] : memref<9x128xf32, #tpu.memory_space<vmem>>, vector<9x128xf32>
    %c0_267 = arith.constant 0 : index
    %c0_268 = arith.constant 0 : index
    %288 = vector.load %arg4[%c0_267, %c0_268] : memref<32x9xf32, #tpu.memory_space<vmem>>, vector<32x9xf32>
    %cst_269 = arith.constant dense<0.000000e+00> : vector<32x128xf32>
    %289 = tpu.matmul %288, %287, %cst_269 {dimension_numbers = #tpu.dot_dimension_numbers<[1], [0], [0], [1], [0, 0, 1, 1], [], []>} : vector<32x9xf32>, vector<9x128xf32>, vector<32x128xf32> -> vector<32x128xf32>
    %c0_270 = arith.constant 0 : index
    %c0_271 = arith.constant 0 : index
    %290 = vector.load %arg5[%c0_270, %c0_271] : memref<32x1xf32, #tpu.memory_space<vmem>>, vector<32x1xf32>
    %291 = vector.broadcast %290 : vector<32x1xf32> to vector<32x128xf32>
    %292 = arith.addf %289, %291 : vector<32x128xf32>
    %cst_272 = arith.constant 0.000000e+00 : f32
    %293 = vector.broadcast %cst_272 : f32 to vector<32x128xf32>
    %294 = arith.cmpf ogt, %292, %293 : vector<32x128xf32>
    %cst_273 = arith.constant 0.00999999977 : f32
    %295 = vector.broadcast %cst_273 : f32 to vector<32x128xf32>
    %296 = arith.mulf %295, %292 : vector<32x128xf32>
    %297 = arith.select %294, %292, %296 : vector<32x128xi1>, vector<32x128xf32>
    %c0_274 = arith.constant 0 : index
    %c0_275 = arith.constant 0 : index
    %298 = vector.load %arg6[%c0_274, %c0_275] : memref<1x32xf32, #tpu.memory_space<vmem>>, vector<1x32xf32>
    %cst_276 = arith.constant dense<0.000000e+00> : vector<1x128xf32>
    %299 = tpu.matmul %298, %297, %cst_276 {dimension_numbers = #tpu.dot_dimension_numbers<[1], [0], [0], [1], [0, 0, 1, 1], [], []>} : vector<1x32xf32>, vector<32x128xf32>, vector<1x128xf32> -> vector<1x128xf32>
    %c0_277 = arith.constant 0 : index
    %c0_278 = arith.constant 0 : index
    %300 = vector.load %arg7[%c0_277, %c0_278] : memref<1x1xf32, #tpu.memory_space<vmem>>, vector<1x1xf32>
    %301 = vector.broadcast %300 : vector<1x1xf32> to vector<1x128xf32>
    %302 = arith.addf %299, %301 : vector<1x128xf32>
    %303 = arith.negf %302 : vector<1x128xf32>
    %304 = math.exp %303 : vector<1x128xf32>
    %cst_279 = arith.constant 1.000000e+00 : f32
    %305 = vector.broadcast %cst_279 : f32 to vector<1x128xf32>
    %306 = arith.addf %305, %304 : vector<1x128xf32>
    %307 = arith.divf %305, %306 : vector<1x128xf32>
    %c0_280 = arith.constant 0 : index
    %c0_281 = arith.constant 0 : index
    %308 = vector.load %arg8[%c0_280, %c0_281] : memref<1x128xf32, #tpu.memory_space<vmem>>, vector<1x128xf32>
    tpu.vector_store %arg8[%c0_280, %c0_281], %307 {strides = array<i32>} : memref<1x128xf32, #tpu.memory_space<vmem>>, vector<1x128xf32>,
    return
  }
}

</mosaic_0001>

<llo_original>
// kernel: get_users_rating.1
$region0: #{get_users_rating.1}
  #allocation0 [shape = 'u32[]', space=smem, size = 0x4, offset = 0x4, fixed_abs, tag = 'smem constant byte address 0x4 - core index']
  #allocation1 [shape = 'u32[144,128]{1,0:T(1,128)}', space=vmem, size = 0x12000, scoped, tag = 'internal scratch']
  #allocation2 [shape = 'f32[24,32]{1,0:T(8,128)}', space=vmem, size = 0x3000, scoped, tag = 'scratch operand']
  #allocation3 [shape = 'f32[24,32]{1,0:T(8,128)}', space=vmem, size = 0x3000, scoped, tag = 'scratch operand']
  #allocation4 [shape = 'f32[48,32]{1,0:T(8,128)}', space=vmem, size = 0x6000, scoped, tag = 'scratch operand']
  #allocation5 [shape = 'f32[24,32]{1,0:T(8,128)}', space=vmem, size = 0x3000, scoped, tag = 'scratch operand']
  #allocation6 [shape = 'f32[9,128]{1,0:T(8,128)}', space=vmem, size = 0x2000, scoped, tag = 'scratch operand']
  #allocation7 [shape = 'f32[1,1]{1,0:T(1,128)S(1)}', space=vmem, size = 0x200, scoped, tag = 'scoped memory for get_users_rating.1']
  %s0 = inlined_call_operand.vmem [shape: s32[8], index: 0, kind: input, shape index: {}]
  %s1 = inlined_call_operand.vmem [shape: f32[24,24], index: 1, kind: input, shape index: {}]
  %s2 = inlined_call_operand.vmem [shape: f32[8,32], index: 2, kind: input, shape index: {}]
  %s3 = inlined_call_operand.vmem [shape: f32[16,32], index: 3, kind: input, shape index: {}]
  %s4 = inlined_call_operand.vmem [shape: f32[32,9], index: 4, kind: input, shape index: {}]
  %s5 = inlined_call_operand.vmem [shape: f32[32,1], index: 5, kind: input, shape index: {}]
  %s6 = inlined_call_operand.vmem [shape: f32[1,32], index: 6, kind: input, shape index: {}]
  %s7 = inlined_call_operand.<no memory space> [shape: f32[1,1], index: 7, kind: input, shape index: {}]
  %s8 = inlined_call_operand.vmem [shape: f32[1,128], index: 8, kind: output, shape index: {}]
  %s9 = sld [smem:[#allocation0]]
  $region46: #{get_users_rating.1} parent=0
    _
  %s11 = ssub.s32 1, %s9
  %s12 = scalar_select 0, %s11, %s9
  %v13 = vstv %s7
  %14 = vst [vmem:[#allocation7] sm:$0x1] %v13
  $region1: #{get_users_rating.1} parent=0
    #allocation8 [shape = 'u8[512]{0}', space=smem, size = 0x200, scoped, tag = 'input window, operand 0, single buffered']
    #allocation9 [shape = 's32[1]{0}', space=sflag, size = 0x4, scoped, tag = 'scoped memory for get_users_rating.1']
    %15 = vsyncpa [#allocation9], 0
    // Predicated region
    $region2: #{get_users_rating.1} parent=1 // pred_check
      _
    $region3: #{get_users_rating.1} parent=1 // pred_check_branch
      %17 = sbr.rel (0) target = $region5
    $region4: #{get_users_rating.1} parent=1 // pred_region
      %s19 = ssub.s32 16, 16
      %20 = vsyncadd [#allocation9], %s19
      %s22 = sshll.u32 %s0, 4
      %s23 = int_to_ptr.vmem [resolvable:$true] %s22
      %25 = dma.vmem_to_smem %s23, 16, [#allocation8], [#allocation9]
    $region5: #{get_users_rating.1} parent=1 // pred_fallthru
      _
    // Predicated region
    $region6: #{get_users_rating.1} parent=1 // pred_check
      _
    $region7: #{get_users_rating.1} parent=1 // pred_check_branch
      %27 = sbr.rel (0) target = $region9
    $region8: #{get_users_rating.1} parent=1 // pred_region
      _
    $region9: #{get_users_rating.1} parent=1 // pred_fallthru
      _
    // Predicated region
    $region10: #{get_users_rating.1} parent=1 // pred_check
      _
    $region11: #{get_users_rating.1} parent=1 // pred_check_branch
      %29 = sbr.rel (0) target = $region13
    $region12: #{get_users_rating.1} parent=1 // pred_region
      _
    $region13: #{get_users_rating.1} parent=1 // pred_fallthru
      _
    // Predicated region
    $region14: #{get_users_rating.1} parent=1 // pred_check
      _
    $region15: #{get_users_rating.1} parent=1 // pred_check_branch
      %31 = sbr.rel (0) target = $region17
    $region16: #{get_users_rating.1} parent=1 // pred_region
      _
    $region17: #{get_users_rating.1} parent=1 // pred_fallthru
      _
    // Predicated region
    $region18: #{get_users_rating.1} parent=1 // pred_check
      _
    $region19: #{get_users_rating.1} parent=1 // pred_check_branch
      %33 = sbr.rel (0) target = $region21
    $region20: #{get_users_rating.1} parent=1 // pred_region
      _
    $region21: #{get_users_rating.1} parent=1 // pred_fallthru
      _
    // Predicated region
    $region22: #{get_users_rating.1} parent=1 // pred_check
      _
    $region23: #{get_users_rating.1} parent=1 // pred_check_branch
      %35 = sbr.rel (0) target = $region25
    $region24: #{get_users_rating.1} parent=1 // pred_region
      _
    $region25: #{get_users_rating.1} parent=1 // pred_fallthru
      _
    // Predicated region
    $region26: #{get_users_rating.1} parent=1 // pred_check
      _
    $region27: #{get_users_rating.1} parent=1 // pred_check_branch
      %37 = sbr.rel (0) target = $region29
    $region28: #{get_users_rating.1} parent=1 // pred_region
      _
    $region29: #{get_users_rating.1} parent=1 // pred_fallthru
      _
    // Predicated region
    $region30: #{get_users_rating.1} parent=1 // pred_check
      _
    $region31: #{get_users_rating.1} parent=1 // pred_check_branch
      %39 = sbr.rel (0) target = $region33
    $region32: #{get_users_rating.1} parent=1 // pred_region
      _
    $region33: #{get_users_rating.1} parent=1 // pred_fallthru
      _
    // Predicated region
    $region34: #{get_users_rating.1} parent=1 // pred_check
      _
    $region35: #{get_users_rating.1} parent=1 // pred_check_branch
      %41 = sbr.rel (0) target = $region37
    $region36: #{get_users_rating.1} parent=1 // pred_region
      %42 = dma.done [#allocation9], 16
    $region37: #{get_users_rating.1} parent=1 // pred_fallthru
      _
    %43 = sfence
    %v44 = vld [vmem:[%s2] sm:$0xff]
    %vm45 = vcmask 261120
    %46 = vst.msk [vmem:[#allocation2] sm:$0xff] %vm45, %v44
    %v47 = vld [vmem:[%s3] sm:$0xff]
    %v48 = vld [vmem:[%s3 + $0x8] sm:$0xff]
    %49 = vst.msk [vmem:[#allocation2 + $0x8] sm:$0xff] %vm45, %v47
    %50 = vst.msk [vmem:[#allocation2 + $0x10] sm:$0xff] %vm45, %v48
    %v51 = vld [vmem:[%s2] sm:$0xff]
    %52 = vst.msk [vmem:[#allocation3] sm:$0xff] %vm45, %v51
    %v53 = vld [vmem:[%s3] sm:$0xff]
    %v54 = vld [vmem:[%s3 + $0x8] sm:$0xff]
    %55 = vst.msk [vmem:[#allocation4] sm:$0xff] %vm45, %v53
    %56 = vst.msk [vmem:[#allocation4 + $0x8] sm:$0xff] %vm45, %v54
    %v57 = vld [vmem:[%s1] sm:$0xff]
    %v58 = vld [vmem:[%s1 + $0x8] sm:$0xff]
    %v59 = vld [vmem:[%s1 + $0x10] sm:$0xff]
    %v60 = vld [vmem:[#allocation2] sm:$0xff]
    %v61 = vld [vmem:[#allocation2 + $0x8] sm:$0xff]
    %v62 = vld [vmem:[#allocation2 + $0x10] sm:$0xff]
    %vm63 = vcmask 195584
    %v65 = vsel %vm63, %v57, 0
    %v68 = vsel %vm63, %v58, 0
    %v71 = vsel %vm63, %v59, 0
    %73 = vmatprep.subr.mxu0 0.0
    %74 = vmatpush1.msra.mxu0 %v60
    %75 = vmatprep.subr.mxu0 0.0
    %76 = vmatpush1.msra.mxu0 %v61
    %77 = vmatprep.subr.mxu0 0.0
    %78 = vmatpush1.msra.mxu0 %v62
    %79 = vmatprep.subr.mxu0 0.0
    %80 = vmatpush1.msra.mxu0 0.0
    %81 = vmatprep.subr.mxu0 0.0
    %82 = vmatpush1.msra.mxu0 0.0
    %83 = vmatprep.subr.mxu0 0.0
    %84 = vmatpush1.msra.mxu0 0.0
    %85 = vmatprep.subr.mxu0 0.0
    %86 = vmatpush1.msra.mxu0 0.0
    %87 = vmatprep.subr.mxu0 0.0
    %88 = vmatpush1.msra.mxu0 0.0
    %89 = vmatprep.subr.mxu0 0.0
    %90 = vmatpush1.msra.mxu0 0.0
    %91 = vmatprep.subr.mxu0 0.0
    %92 = vmatpush1.msra.mxu0 0.0
    %93 = vmatprep.subr.mxu0 0.0
    %94 = vmatpush1.msra.mxu0 0.0
    %95 = vmatprep.subr.mxu0 0.0
    %96 = vmatpush1.msra.mxu0 0.0
    %97 = vmatprep.subr.mxu0 0.0
    %98 = vmatpush1.msra.mxu0 0.0
    %99 = vmatprep.subr.mxu0 0.0
    %100 = vmatpush1.msra.mxu0 0.0
    %101 = vmatprep.subr.mxu0 0.0
    %102 = vmatpush1.msra.mxu0 0.0
    %103 = vmatprep.subr.mxu0 0.0
    %104 = vmatpush1.msra.mxu0 0.0
    %105 = vmatprep.subr.mxu0 0.0
    %106 = vmatpush1.msra.mxu0 0.0
    %107 = vmatprep.subr.mxu0 0.0
    %108 = vmatpush1.msra.mxu0 0.0
    %109 = vmatprep.subr.mxu0 0.0
    %110 = vmatpush1.msra.mxu0 0.0
    %111 = vmatprep.subr.mxu0 0.0
    %112 = vmatpush1.msra.mxu0 0.0
    %113 = vmatprep.subr.mxu0 0.0
    %114 = vmatpush1.msra.mxu0 0.0
    %115 = vmatprep.subr.mxu0 0.0
    %116 = vmatpush1.msra.mxu0 0.0
    %117 = vmatprep.subr.mxu0 0.0
    %118 = vmatpush1.msra.mxu0 0.0
    %119 = vmatprep.subr.mxu0 0.0
    %120 = vmatpush1.msra.mxu0 0.0
    %121 = vmatprep.subr.mxu0 0.0
    %122 = vmatpush1.msra.mxu0 0.0
    %123 = vmatprep.subr.mxu0 0.0
    %124 = vmatpush1.msra.mxu0 0.0
    %125 = vmatprep.subr.mxu0 0.0
    %126 = vmatpush1.msra.mxu0 0.0
    %127 = vmatprep.subr.mxu0 0.0
    %128 = vmatpush1.msra.mxu0 0.0
    %129 = vmatprep.subr.mxu0 0.0
    %130 = vmatpush1.msra.mxu0 0.0
    %131 = vmatprep.subr.mxu0 0.0
    %132 = vmatpush1.msra.mxu0 0.0
    %133 = vmatprep.subr.mxu0 0.0
    %134 = vmatpush1.msra.mxu0 0.0
    %135 = vmatprep.subr.mxu0 0.0
    %136 = vmatpush1.msra.mxu0 0.0
    %137 = vmatprep.mubr.f32.mxu0 0.0
    %138 = vmatmul.mubr.f32.gmra.mrb[0].mxu0 %v65
    %v139 = vpop.f32.mrb[0].mxu0
    %v140 = vadd.f32 0.0, %v139
    %v141 = vpop.f32.mrb[0].mxu0
    %142 = vmatprep.mubr.f32.mxu0 0.0
    %143 = vmatmul.mubr.f32.gmra.mrb[0].mxu0 %v68
    %v144 = vpop.f32.mrb[0].mxu0
    %v145 = vadd.f32 0.0, %v144
    %v146 = vpop.f32.mrb[0].mxu0
    %147 = vmatprep.mubr.f32.mxu0 0.0
    %148 = vmatmul.mubr.f32.gmra.mrb[0].mxu0 %v71
    %v149 = vpop.f32.mrb[0].mxu0
    %v150 = vadd.f32 0.0, %v149
    %v151 = vpop.f32.mrb[0].mxu0
    %152 = vdwg.mxu0
    %153 = vst.msk [vmem:[#allocation3 + $0x8] sm:$0xff] %vm45, %v140
    %154 = vst.msk [vmem:[#allocation4 + $0x10] sm:$0xff] %vm45, %v145
    %155 = vst.msk [vmem:[#allocation4 + $0x18] sm:$0xff] %vm45, %v150
    %156 = vmatprep.subr.mxu0 0.0
    %157 = vmatpush1.msra.mxu0 %v140
    %158 = vmatprep.subr.mxu0 0.0
    %159 = vmatpush1.msra.mxu0 %v145
    %160 = vmatprep.subr.mxu0 0.0
    %161 = vmatpush1.msra.mxu0 %v150
    %162 = vmatprep.subr.mxu0 0.0
    %163 = vmatpush1.msra.mxu0 0.0
    %164 = vmatprep.subr.mxu0 0.0
    %165 = vmatpush1.msra.mxu0 0.0
    %166 = vmatprep.subr.mxu0 0.0
    %167 = vmatpush1.msra.mxu0 0.0
    %168 = vmatprep.subr.mxu0 0.0
    %169 = vmatpush1.msra.mxu0 0.0
    %170 = vmatprep.subr.mxu0 0.0
    %171 = vmatpush1.msra.mxu0 0.0
    %172 = vmatprep.subr.mxu0 0.0
    %173 = vmatpush1.msra.mxu0 0.0
    %174 = vmatprep.subr.mxu0 0.0
    %175 = vmatpush1.msra.mxu0 0.0
    %176 = vmatprep.subr.mxu0 0.0
    %177 = vmatpush1.msra.mxu0 0.0
    %178 = vmatprep.subr.mxu0 0.0
    %179 = vmatpush1.msra.mxu0 0.0
    %180 = vmatprep.subr.mxu0 0.0
    %181 = vmatpush1.msra.mxu0 0.0
    %182 = vmatprep.subr.mxu0 0.0
    %183 = vmatpush1.msra.mxu0 0.0
    %184 = vmatprep.subr.mxu0 0.0
    %185 = vmatpush1.msra.mxu0 0.0
    %186 = vmatprep.subr.mxu0 0.0
    %187 = vmatpush1.msra.mxu0 0.0
    %188 = vmatprep.subr.mxu0 0.0
    %189 = vmatpush1.msra.mxu0 0.0
    %190 = vmatprep.subr.mxu0 0.0
    %191 = vmatpush1.msra.mxu0 0.0
    %192 = vmatprep.subr.mxu0 0.0
    %193 = vmatpush1.msra.mxu0 0.0
    %194 = vmatprep.subr.mxu0 0.0
    %195 = vmatpush1.msra.mxu0 0.0
    %196 = vmatprep.subr.mxu0 0.0
    %197 = vmatpush1.msra.mxu0 0.0
    %198 = vmatprep.subr.mxu0 0.0
    %199 = vmatpush1.msra.mxu0 0.0
    %200 = vmatprep.subr.mxu0 0.0
    %201 = vmatpush1.msra.mxu0 0.0
    %202 = vmatprep.subr.mxu0 0.0
    %203 = vmatpush1.msra.mxu0 0.0
    %204 = vmatprep.subr.mxu0 0.0
    %205 = vmatpush1.msra.mxu0 0.0
    %206 = vmatprep.subr.mxu0 0.0
    %207 = vmatpush1.msra.mxu0 0.0
    %208 = vmatprep.subr.mxu0 0.0
    %209 = vmatpush1.msra.mxu0 0.0
    %210 = vmatprep.subr.mxu0 0.0
    %211 = vmatpush1.msra.mxu0 0.0
    %212 = vmatprep.subr.mxu0 0.0
    %213 = vmatpush1.msra.mxu0 0.0
    %214 = vmatprep.subr.mxu0 0.0
    %215 = vmatpush1.msra.mxu0 0.0
    %216 = vmatprep.subr.mxu0 0.0
    %217 = vmatpush1.msra.mxu0 0.0
    %218 = vmatprep.subr.mxu0 0.0
    %219 = vmatpush1.msra.mxu0 0.0
    %220 = vmatprep.mubr.f32.mxu0 0.0
    %221 = vmatmul.mubr.f32.gmra.mrb[0].mxu0 %v65
    %v222 = vpop.f32.mrb[0].mxu0
    %v223 = vadd.f32 0.0, %v222
    %v224 = vpop.f32.mrb[0].mxu0
    %225 = vmatprep.mubr.f32.mxu0 0.0
    %226 = vmatmul.mubr.f32.gmra.mrb[0].mxu0 %v68
    %v227 = vpop.f32.mrb[0].mxu0
    %v228 = vadd.f32 0.0, %v227
    %v229 = vpop.f32.mrb[0].mxu0
    %230 = vmatprep.mubr.f32.mxu0 0.0
    %231 = vmatmul.mubr.f32.gmra.mrb[0].mxu0 %v71
    %v232 = vpop.f32.mrb[0].mxu0
    %v233 = vadd.f32 0.0, %v232
    %v234 = vpop.f32.mrb[0].mxu0
    %235 = vdwg.mxu0
    %236 = vst.msk [vmem:[#allocation3 + $0x10] sm:$0xff] %vm45, %v223
    %237 = vst.msk [vmem:[#allocation4 + $0x20] sm:$0xff] %vm45, %v228
    %238 = vst.msk [vmem:[#allocation4 + $0x28] sm:$0xff] %vm45, %v233
    %s239 = sld [smem:[#allocation8]]
    %s240 = scalar_lea.vmem [#allocation3], %s239
    %v241 = vld [vmem:[%s240] sm:$0x1]
    %vm242 = vcmask 253952
    %243 = vst.msk [vmem:[#allocation5] sm:$0x1] %vm242, %v241
    %s244 = sld [smem:[#allocation8 + $0x1]]
    %s245 = scalar_lea.vmem [#allocation3], %s244
    %v246 = vld [vmem:[%s245] sm:$0x1]
    %247 = vst.msk [vmem:[#allocation5 + $0x1] sm:$0x1] %vm242, %v246
    %s248 = sld [smem:[#allocation8 + $0x2]]
    %s249 = scalar_lea.vmem [#allocation3], %s248
    %v250 = vld [vmem:[%s249] sm:$0x1]
    %251 = vst.msk [vmem:[#allocation5 + $0x2] sm:$0x1] %vm242, %v250
    %s252 = sld [smem:[#allocation8 + $0x3]]
    %s253 = scalar_lea.vmem [#allocation3], %s252
    %v254 = vld [vmem:[%s253] sm:$0x1]
    %255 = vst.msk [vmem:[#allocation5 + $0x3] sm:$0x1] %vm242, %v254
    %s256 = sld [smem:[#allocation8 + $0x4]]
    %s257 = scalar_lea.vmem [#allocation3], %s256
    %v258 = vld [vmem:[%s257] sm:$0x1]
    %259 = vst.msk [vmem:[#allocation5 + $0x4] sm:$0x1] %vm242, %v258
    %s260 = sld [smem:[#allocation8 + $0x5]]
    %s261 = scalar_lea.vmem [#allocation3], %s260
    %v262 = vld [vmem:[%s261] sm:$0x1]
    %263 = vst.msk [vmem:[#allocation5 + $0x5] sm:$0x1] %vm242, %v262
    %s264 = sld [smem:[#allocation8 + $0x6]]
    %s265 = scalar_lea.vmem [#allocation3], %s264
    %v266 = vld [vmem:[%s265] sm:$0x1]
    %267 = vst.msk [vmem:[#allocation5 + $0x6] sm:$0x1] %vm242, %v266
    %s268 = sld [smem:[#allocation8 + $0x7]]
    %s269 = scalar_lea.vmem [#allocation3], %s268
    %v270 = vld [vmem:[%s269] sm:$0x1]
    %271 = vst.msk [vmem:[#allocation5 + $0x7] sm:$0x1] %vm242, %v270
    %s272 = sld [smem:[#allocation8]]
    %s273 = sadd.s32 %s272, 8
    %s274 = scalar_lea.vmem [#allocation3], %s273
    %v275 = vld [vmem:[%s274] sm:$0x1]
    %276 = vst.msk [vmem:[#allocation5 + $0x8] sm:$0x1] %vm242, %v275
    %s277 = sld [smem:[#allocation8 + $0x1]]
    %s278 = sadd.s32 %s277, 8
    %s279 = scalar_lea.vmem [#allocation3], %s278
    %v280 = vld [vmem:[%s279] sm:$0x1]
    %281 = vst.msk [vmem:[#allocation5 + $0x9] sm:$0x1] %vm242, %v280
    %s282 = sld [smem:[#allocation8 + $0x2]]
    %s283 = sadd.s32 %s282, 8
    %s284 = scalar_lea.vmem [#allocation3], %s283
    %v285 = vld [vmem:[%s284] sm:$0x1]
    %286 = vst.msk [vmem:[#allocation5 + $0xa] sm:$0x1] %vm242, %v285
    %s287 = sld [smem:[#allocation8 + $0x3]]
    %s288 = sadd.s32 %s287, 8
    %s289 = scalar_lea.vmem [#allocation3], %s288
    %v290 = vld [vmem:[%s289] sm:$0x1]
    %291 = vst.msk [vmem:[#allocation5 + $0xb] sm:$0x1] %vm242, %v290
    %s292 = sld [smem:[#allocation8 + $0x4]]
    %s293 = sadd.s32 %s292, 8
    %s294 = scalar_lea.vmem [#allocation3], %s293
    %v295 = vld [vmem:[%s294] sm:$0x1]
    %296 = vst.msk [vmem:[#allocation5 + $0xc] sm:$0x1] %vm242, %v295
    %s297 = sld [smem:[#allocation8 + $0x5]]
    %s298 = sadd.s32 %s297, 8
    %s299 = scalar_lea.vmem [#allocation3], %s298
    %v300 = vld [vmem:[%s299] sm:$0x1]
    %301 = vst.msk [vmem:[#allocation5 + $0xd] sm:$0x1] %vm242, %v300
    %s302 = sld [smem:[#allocation8 + $0x6]]
    %s303 = sadd.s32 %s302, 8
    %s304 = scalar_lea.vmem [#allocation3], %s303
    %v305 = vld [vmem:[%s304] sm:$0x1]
    %306 = vst.msk [vmem:[#allocation5 + $0xe] sm:$0x1] %vm242, %v305
    %s307 = sld [smem:[#allocation8 + $0x7]]
    %s308 = sadd.s32 %s307, 8
    %s309 = scalar_lea.vmem [#allocation3], %s308
    %v310 = vld [vmem:[%s309] sm:$0x1]
    %311 = vst.msk [vmem:[#allocation5 + $0xf] sm:$0x1] %vm242, %v310
    %s312 = sld [smem:[#allocation8]]
    %s313 = sadd.s32 %s312, 16
    %s314 = scalar_lea.vmem [#allocation3], %s313
    %v315 = vld [vmem:[%s314] sm:$0x1]
    %316 = vst.msk [vmem:[#allocation5 + $0x10] sm:$0x1] %vm242, %v315
    %s317 = sld [smem:[#allocation8 + $0x1]]
    %s318 = sadd.s32 %s317, 16
    %s319 = scalar_lea.vmem [#allocation3], %s318
    %v320 = vld [vmem:[%s319] sm:$0x1]
    %321 = vst.msk [vmem:[#allocation5 + $0x11] sm:$0x1] %vm242, %v320
    %s322 = sld [smem:[#allocation8 + $0x2]]
    %s323 = sadd.s32 %s322, 16
    %s324 = scalar_lea.vmem [#allocation3], %s323
    %v325 = vld [vmem:[%s324] sm:$0x1]
    %326 = vst.msk [vmem:[#allocation5 + $0x12] sm:$0x1] %vm242, %v325
    %s327 = sld [smem:[#allocation8 + $0x3]]
    %s328 = sadd.s32 %s327, 16
    %s329 = scalar_lea.vmem [#allocation3], %s328
    %v330 = vld [vmem:[%s329] sm:$0x1]
    %331 = vst.msk [vmem:[#allocation5 + $0x13] sm:$0x1] %vm242, %v330
    %s332 = sld [smem:[#allocation8 + $0x4]]
    %s333 = sadd.s32 %s332, 16
    %s334 = scalar_lea.vmem [#allocation3], %s333
    %v335 = vld [vmem:[%s334] sm:$0x1]
    %336 = vst.msk [vmem:[#allocation5 + $0x14] sm:$0x1] %vm242, %v335
    %s337 = sld [smem:[#allocation8 + $0x5]]
    %s338 = sadd.s32 %s337, 16
    %s339 = scalar_lea.vmem [#allocation3], %s338
    %v340 = vld [vmem:[%s339] sm:$0x1]
    %341 = vst.msk [vmem:[#allocation5 + $0x15] sm:$0x1] %vm242, %v340
    %s342 = sld [smem:[#allocation8 + $0x6]]
    %s343 = sadd.s32 %s342, 16
    %s344 = scalar_lea.vmem [#allocation3], %s343
    %v345 = vld [vmem:[%s344] sm:$0x1]
    %346 = vst.msk [vmem:[#allocation5 + $0x16] sm:$0x1] %vm242, %v345
    %s347 = sld [smem:[#allocation8 + $0x7]]
    %s348 = sadd.s32 %s347, 16
    %s349 = scalar_lea.vmem [#allocation3], %s348
    %v350 = vld [vmem:[%s349] sm:$0x1]
    %351 = vst.msk [vmem:[#allocation5 + $0x17] sm:$0x1] %vm242, %v350
    %v352 = vld [vmem:[#allocation5] sm:$0xff]
    %v353 = vld [vmem:[#allocation5 + $0x8] sm:$0xff]
    %v354 = vld [vmem:[#allocation5 + $0x10] sm:$0xff]
    %v355 = vld [vmem:[#allocation4] sm:$0xff]
    %v356 = vld [vmem:[#allocation4 + $0x8] sm:$0xff]
    %v357 = vld [vmem:[#allocation4 + $0x10] sm:$0xff]
    %v358 = vld [vmem:[#allocation4 + $0x18] sm:$0xff]
    %v359 = vld [vmem:[#allocation4 + $0x20] sm:$0xff]
    %v360 = vld [vmem:[#allocation4 + $0x28] sm:$0xff]
    %v362 = vsel %vm45, %v352, 0
    %v365 = vsel %vm45, %v353, 0
    %v368 = vsel %vm45, %v354, 0
    %v371 = vsel %vm45, %v355, 0
    %v374 = vsel %vm45, %v356, 0
    %v377 = vsel %vm45, %v357, 0
    %v380 = vsel %vm45, %v358, 0
    %v383 = vsel %vm45, %v359, 0
    %v386 = vsel %vm45, %v360, 0
    %388 = vmatprep.subr.mxu0 0.0
    %389 = vmatpush1.xpose.msra.mxu0 %v371
    %390 = vmatprep.subr.mxu0 0.0
    %391 = vmatpush1.xpose.msra.mxu0 %v374
    %392 = vmatprep.subr.mxu0 0.0
    %393 = vmatpush1.xpose.msra.mxu0 %v377
    %394 = vmatprep.subr.mxu0 0.0
    %395 = vmatpush1.xpose.msra.mxu0 %v380
    %396 = vmatprep.subr.mxu0 0.0
    %397 = vmatpush1.xpose.msra.mxu0 %v383
    %398 = vmatprep.subr.mxu0 0.0
    %399 = vmatpush1.xpose.msra.mxu0 %v386
    %400 = vmatprep.subr.mxu0 0.0
    %401 = vmatpush1.xpose.msra.mxu0 0.0
    %402 = vmatprep.subr.mxu0 0.0
    %403 = vmatpush1.xpose.msra.mxu0 0.0
    %404 = vmatprep.subr.mxu0 0.0
    %405 = vmatpush1.xpose.msra.mxu0 0.0
    %406 = vmatprep.subr.mxu0 0.0
    %407 = vmatpush1.xpose.msra.mxu0 0.0
    %408 = vmatprep.subr.mxu0 0.0
    %409 = vmatpush1.xpose.msra.mxu0 0.0
    %410 = vmatprep.subr.mxu0 0.0
    %411 = vmatpush1.xpose.msra.mxu0 0.0
    %412 = vmatprep.subr.mxu0 0.0
    %413 = vmatpush1.xpose.msra.mxu0 0.0
    %414 = vmatprep.subr.mxu0 0.0
    %415 = vmatpush1.xpose.msra.mxu0 0.0
    %416 = vmatprep.subr.mxu0 0.0
    %417 = vmatpush1.xpose.msra.mxu0 0.0
    %418 = vmatprep.subr.mxu0 0.0
    %419 = vmatpush1.xpose.msra.mxu0 0.0
    %420 = vmatprep.subr.mxu0 0.0
    %421 = vmatpush1.xpose.msra.mxu0 0.0
    %422 = vmatprep.subr.mxu0 0.0
    %423 = vmatpush1.xpose.msra.mxu0 0.0
    %424 = vmatprep.subr.mxu0 0.0
    %425 = vmatpush1.xpose.msra.mxu0 0.0
    %426 = vmatprep.subr.mxu0 0.0
    %427 = vmatpush1.xpose.msra.mxu0 0.0
    %428 = vmatprep.subr.mxu0 0.0
    %429 = vmatpush1.xpose.msra.mxu0 0.0
    %430 = vmatprep.subr.mxu0 0.0
    %431 = vmatpush1.xpose.msra.mxu0 0.0
    %432 = vmatprep.subr.mxu0 0.0
    %433 = vmatpush1.xpose.msra.mxu0 0.0
    %434 = vmatprep.subr.mxu0 0.0
    %435 = vmatpush1.xpose.msra.mxu0 0.0
    %436 = vmatprep.subr.mxu0 0.0
    %437 = vmatpush1.xpose.msra.mxu0 0.0
    %438 = vmatprep.subr.mxu0 0.0
    %439 = vmatpush1.xpose.msra.mxu0 0.0
    %440 = vmatprep.subr.mxu0 0.0
    %441 = vmatpush1.xpose.msra.mxu0 0.0
    %442 = vmatprep.subr.mxu0 0.0
    %443 = vmatpush1.xpose.msra.mxu0 0.0
    %444 = vmatprep.subr.mxu0 0.0
    %445 = vmatpush1.xpose.msra.mxu0 0.0
    %446 = vmatprep.subr.mxu0 0.0
    %447 = vmatpush1.xpose.msra.mxu0 0.0
    %448 = vmatprep.subr.mxu0 0.0
    %449 = vmatpush1.xpose.msra.mxu0 0.0
    %450 = vmatprep.subr.mxu0 0.0
    %451 = vmatpush1.xpose.msra.mxu0 0.0
    %452 = vmatprep.mubr.f32.mxu0 0.0
    %453 = vmatmul.mubr.f32.gmra.mrb[0].mxu0 %v362
    %v454 = vpop.f32.mrb[0].mxu0
    %v455 = vadd.f32 0.0, %v454
    %v456 = vpop.f32.mrb[0].mxu0
    %457 = vmatprep.mubr.f32.mxu0 0.0
    %458 = vmatmul.mubr.f32.gmra.mrb[0].mxu0 %v365
    %v459 = vpop.f32.mrb[0].mxu0
    %v460 = vadd.f32 0.0, %v459
    %v461 = vpop.f32.mrb[0].mxu0
    %462 = vmatprep.mubr.f32.mxu0 0.0
    %463 = vmatmul.mubr.f32.gmra.mrb[0].mxu0 %v368
    %v464 = vpop.f32.mrb[0].mxu0
    %v465 = vadd.f32 0.0, %v464
    %v466 = vpop.f32.mrb[0].mxu0
    %467 = vdwg.mxu0
    %vm468 = vcmask 122880
    %469 = vst.msk [vmem:[#allocation6] sm:$0x1] %vm468, %v455
    %471 = vrot.lane.b32.xlu0 %v455, 16
    %v472 = vpop.permute.xlu0 %471
    %vm474 = vcmask 255105
    %475 = vst.msk [vmem:[#allocation6 - $0x1] sm:$0x2] %vm474, %v472
    %476 = vrot.lane.b32.xlu0 %v455, 32
    %v477 = vpop.permute.xlu0 %476
    %vm479 = vcmask 387330
    %480 = vst.msk [vmem:[#allocation6 - $0x2] sm:$0x4] %vm479, %v477
    %481 = vrot.lane.b32.xlu0 %v455, 48
    %v482 = vpop.permute.xlu0 %481
    %vm484 = vcmask 519555
    %485 = vst.msk [vmem:[#allocation6 - $0x3] sm:$0x8] %vm484, %v482
    %486 = vrot.lane.b32.xlu0 %v455, 64
    %v487 = vpop.permute.xlu0 %486
    %vm489 = vcmask 651780
    %490 = vst.msk [vmem:[#allocation6 - $0x4] sm:$0x10] %vm489, %v487
    %491 = vrot.lane.b32.xlu0 %v455, 80
    %v492 = vpop.permute.xlu0 %491
    %vm494 = vcmask 784005
    %495 = vst.msk [vmem:[#allocation6 - $0x5] sm:$0x20] %vm494, %v492
    %496 = vrot.lane.b32.xlu0 %v455, 96
    %v497 = vpop.permute.xlu0 %496
    %vm499 = vcmask 916230
    %500 = vst.msk [vmem:[#allocation6 - $0x6] sm:$0x40] %vm499, %v497
    %501 = vrot.lane.b32.xlu0 %v455, 112
    %v502 = vpop.permute.xlu0 %501
    %vm504 = vcmask 1048455
    %505 = vst.msk [vmem:[#allocation6 - $0x7] sm:$0x80] %vm504, %v502
    %506 = vst.msk [vmem:[#allocation6 + $0x1] sm:$0x1] %vm468, %v502
    %507 = vst.msk [vmem:[#allocation6] sm:$0x2] %vm474, %v455
    %508 = vst.msk [vmem:[#allocation6 - $0x1] sm:$0x4] %vm479, %v472
    %509 = vst.msk [vmem:[#allocation6 - $0x2] sm:$0x8] %vm484, %v477
    %510 = vst.msk [vmem:[#allocation6 - $0x3] sm:$0x10] %vm489, %v482
    %511 = vst.msk [vmem:[#allocation6 - $0x4] sm:$0x20] %vm494, %v487
    %512 = vst.msk [vmem:[#allocation6 - $0x5] sm:$0x40] %vm499, %v492
    %513 = vst.msk [vmem:[#allocation6 - $0x6] sm:$0x80] %vm504, %v497
    %514 = vst.msk [vmem:[#allocation6 + $0x2] sm:$0x1] %vm468, %v497
    %515 = vst.msk [vmem:[#allocation6 + $0x1] sm:$0x2] %vm474, %v502
    %516 = vst.msk [vmem:[#allocation6] sm:$0x4] %vm479, %v455
    %517 = vst.msk [vmem:[#allocation6 - $0x1] sm:$0x8] %vm484, %v472
    %518 = vst.msk [vmem:[#allocation6 - $0x2] sm:$0x10] %vm489, %v477
    %519 = vst.msk [vmem:[#allocation6 - $0x3] sm:$0x20] %vm494, %v482
    %520 = vst.msk [vmem:[#allocation6 - $0x4] sm:$0x40] %vm499, %v487
    %521 = vst.msk [vmem:[#allocation6 - $0x5] sm:$0x80] %vm504, %v492
    %522 = vst.msk [vmem:[#allocation6 + $0x3] sm:$0x1] %vm468, %v460
    %524 = vrot.lane.b32.xlu0 %v460, 16
    %v525 = vpop.permute.xlu0 %524
    %527 = vst.msk [vmem:[#allocation6 + $0x2] sm:$0x2] %vm474, %v525
    %528 = vrot.lane.b32.xlu0 %v460, 32
    %v529 = vpop.permute.xlu0 %528
    %531 = vst.msk [vmem:[#allocation6 + $0x1] sm:$0x4] %vm479, %v529
    %532 = vrot.lane.b32.xlu0 %v460, 48
    %v533 = vpop.permute.xlu0 %532
    %535 = vst.msk [vmem:[#allocation6] sm:$0x8] %vm484, %v533
    %536 = vrot.lane.b32.xlu0 %v460, 64
    %v537 = vpop.permute.xlu0 %536
    %539 = vst.msk [vmem:[#allocation6 - $0x1] sm:$0x10] %vm489, %v537
    %540 = vrot.lane.b32.xlu0 %v460, 80
    %v541 = vpop.permute.xlu0 %540
    %543 = vst.msk [vmem:[#allocation6 - $0x2] sm:$0x20] %vm494, %v541
    %544 = vrot.lane.b32.xlu0 %v460, 96
    %v545 = vpop.permute.xlu0 %544
    %547 = vst.msk [vmem:[#allocation6 - $0x3] sm:$0x40] %vm499, %v545
    %548 = vrot.lane.b32.xlu0 %v460, 112
    %v549 = vpop.permute.xlu0 %548
    %551 = vst.msk [vmem:[#allocation6 - $0x4] sm:$0x80] %vm504, %v549
    %552 = vst.msk [vmem:[#allocation6 + $0x4] sm:$0x1] %vm468, %v549
    %553 = vst.msk [vmem:[#allocation6 + $0x3] sm:$0x2] %vm474, %v460
    %554 = vst.msk [vmem:[#allocation6 + $0x2] sm:$0x4] %vm479, %v525
    %555 = vst.msk [vmem:[#allocation6 + $0x1] sm:$0x8] %vm484, %v529
    %556 = vst.msk [vmem:[#allocation6] sm:$0x10] %vm489, %v533
    %557 = vst.msk [vmem:[#allocation6 - $0x1] sm:$0x20] %vm494, %v537
    %558 = vst.msk [vmem:[#allocation6 - $0x2] sm:$0x40] %vm499, %v541
    %559 = vst.msk [vmem:[#allocation6 - $0x3] sm:$0x80] %vm504, %v545
    %560 = vst.msk [vmem:[#allocation6 + $0x5] sm:$0x1] %vm468, %v545
    %561 = vst.msk [vmem:[#allocation6 + $0x4] sm:$0x2] %vm474, %v549
    %562 = vst.msk [vmem:[#allocation6 + $0x3] sm:$0x4] %vm479, %v460
    %563 = vst.msk [vmem:[#allocation6 + $0x2] sm:$0x8] %vm484, %v525
    %564 = vst.msk [vmem:[#allocation6 + $0x1] sm:$0x10] %vm489, %v529
    %565 = vst.msk [vmem:[#allocation6] sm:$0x20] %vm494, %v533
    %566 = vst.msk [vmem:[#allocation6 - $0x1] sm:$0x40] %vm499, %v537
    %567 = vst.msk [vmem:[#allocation6 - $0x2] sm:$0x80] %vm504, %v541
    %568 = vst.msk [vmem:[#allocation6 + $0x6] sm:$0x1] %vm468, %v465
    %570 = vrot.lane.b32.xlu0 %v465, 16
    %v571 = vpop.permute.xlu0 %570
    %573 = vst.msk [vmem:[#allocation6 + $0x5] sm:$0x2] %vm474, %v571
    %574 = vrot.lane.b32.xlu0 %v465, 32
    %v575 = vpop.permute.xlu0 %574
    %577 = vst.msk [vmem:[#allocation6 + $0x4] sm:$0x4] %vm479, %v575
    %578 = vrot.lane.b32.xlu0 %v465, 48
    %v579 = vpop.permute.xlu0 %578
    %581 = vst.msk [vmem:[#allocation6 + $0x3] sm:$0x8] %vm484, %v579
    %582 = vrot.lane.b32.xlu0 %v465, 64
    %v583 = vpop.permute.xlu0 %582
    %585 = vst.msk [vmem:[#allocation6 + $0x2] sm:$0x10] %vm489, %v583
    %586 = vrot.lane.b32.xlu0 %v465, 80
    %v587 = vpop.permute.xlu0 %586
    %589 = vst.msk [vmem:[#allocation6 + $0x1] sm:$0x20] %vm494, %v587
    %590 = vrot.lane.b32.xlu0 %v465, 96
    %v591 = vpop.permute.xlu0 %590
    %593 = vst.msk [vmem:[#allocation6] sm:$0x40] %vm499, %v591
    %594 = vrot.lane.b32.xlu0 %v465, 112
    %v595 = vpop.permute.xlu0 %594
    %597 = vst.msk [vmem:[#allocation6 - $0x1] sm:$0x80] %vm504, %v595
    %598 = vst.msk [vmem:[#allocation6 + $0x7] sm:$0x1] %vm468, %v595
    %599 = vst.msk [vmem:[#allocation6 + $0x6] sm:$0x2] %vm474, %v465
    %600 = vst.msk [vmem:[#allocation6 + $0x5] sm:$0x4] %vm479, %v571
    %601 = vst.msk [vmem:[#allocation6 + $0x4] sm:$0x8] %vm484, %v575
    %602 = vst.msk [vmem:[#allocation6 + $0x3] sm:$0x10] %vm489, %v579
    %603 = vst.msk [vmem:[#allocation6 + $0x2] sm:$0x20] %vm494, %v583
    %604 = vst.msk [vmem:[#allocation6 + $0x1] sm:$0x40] %vm499, %v587
    %605 = vst.msk [vmem:[#allocation6] sm:$0x80] %vm504, %v591
    %606 = vst.msk [vmem:[#allocation6 + $0x8] sm:$0x1] %vm468, %v591
    %607 = vst.msk [vmem:[#allocation6 + $0x7] sm:$0x2] %vm474, %v595
    %608 = vst.msk [vmem:[#allocation6 + $0x6] sm:$0x4] %vm479, %v465
    %609 = vst.msk [vmem:[#allocation6 + $0x5] sm:$0x8] %vm484, %v571
    %610 = vst.msk [vmem:[#allocation6 + $0x4] sm:$0x10] %vm489, %v575
    %611 = vst.msk [vmem:[#allocation6 + $0x3] sm:$0x20] %vm494, %v579
    %612 = vst.msk [vmem:[#allocation6 + $0x2] sm:$0x40] %vm499, %v583
    %613 = vst.msk [vmem:[#allocation6 + $0x1] sm:$0x80] %vm504, %v587
    %v614 = vld [vmem:[#allocation6] sm:$0xff]
    %v615 = vld [vmem:[#allocation6 + $0x8] sm:$0x1]
    %v616 = vld [vmem:[%s4] sm:$0xff]
    %v617 = vld [vmem:[%s4 + $0x8] sm:$0xff]
    %v618 = vld [vmem:[%s4 + $0x10] sm:$0xff]
    %v619 = vld [vmem:[%s4 + $0x18] sm:$0xff]
    %v620 = vld [vmem:[%s5] sm:$0xff]
    %v621 = vld [vmem:[%s5 + $0x8] sm:$0xff]
    %v622 = vld [vmem:[%s5 + $0x10] sm:$0xff]
    %v623 = vld [vmem:[%s5 + $0x18] sm:$0xff]
    %625 = vset.pattern.permute.xlu0 0
    %626 = vperm.xlu0 %625, %v620
    %v627 = vpop.permute.xlu0 %626
    %630 = vset.pattern.permute.xlu0 0
    %631 = vperm.xlu0 %630, %v621
    %v632 = vpop.permute.xlu0 %631
    %635 = vset.pattern.permute.xlu0 0
    %636 = vperm.xlu0 %635, %v622
    %v637 = vpop.permute.xlu0 %636
    %640 = vset.pattern.permute.xlu0 0
    %641 = vperm.xlu0 %640, %v623
    %v642 = vpop.permute.xlu0 %641
    %vm644 = vcmask 72704
    %v646 = vsel %vm644, %v616, 0
    %v649 = vsel %vm644, %v617, 0
    %v652 = vsel %vm644, %v618, 0
    %v655 = vsel %vm644, %v619, 0
    %vm657 = vcmask 1040384
    %v659 = vsel %vm657, %v615, 0
    %661 = vmatprep.subr.mxu0 0.0
    %662 = vmatpush1.msra.mxu0 %v614
    %663 = vmatprep.subr.mxu0 0.0
    %664 = vmatpush1.msra.mxu0 %v659
    %665 = vmatprep.subr.mxu0 0.0
    %666 = vmatpush1.msra.mxu0 0.0
    %667 = vmatprep.subr.mxu0 0.0
    %668 = vmatpush1.msra.mxu0 0.0
    %669 = vmatprep.subr.mxu0 0.0
    %670 = vmatpush1.msra.mxu0 0.0
    %671 = vmatprep.subr.mxu0 0.0
    %672 = vmatpush1.msra.mxu0 0.0
    %673 = vmatprep.subr.mxu0 0.0
    %674 = vmatpush1.msra.mxu0 0.0
    %675 = vmatprep.subr.mxu0 0.0
    %676 = vmatpush1.msra.mxu0 0.0
    %677 = vmatprep.subr.mxu0 0.0
    %678 = vmatpush1.msra.mxu0 0.0
    %679 = vmatprep.subr.mxu0 0.0
    %680 = vmatpush1.msra.mxu0 0.0
    %681 = vmatprep.subr.mxu0 0.0
    %682 = vmatpush1.msra.mxu0 0.0
    %683 = vmatprep.subr.mxu0 0.0
    %684 = vmatpush1.msra.mxu0 0.0
    %685 = vmatprep.subr.mxu0 0.0
    %686 = vmatpush1.msra.mxu0 0.0
    %687 = vmatprep.subr.mxu0 0.0
    %688 = vmatpush1.msra.mxu0 0.0
    %689 = vmatprep.subr.mxu0 0.0
    %690 = vmatpush1.msra.mxu0 0.0
    %691 = vmatprep.subr.mxu0 0.0
    %692 = vmatpush1.msra.mxu0 0.0
    %693 = vmatprep.subr.mxu0 0.0
    %694 = vmatpush1.msra.mxu0 0.0
    %695 = vmatprep.subr.mxu0 0.0
    %696 = vmatpush1.msra.mxu0 0.0
    %697 = vmatprep.subr.mxu0 0.0
    %698 = vmatpush1.msra.mxu0 0.0
    %699 = vmatprep.subr.mxu0 0.0
    %700 = vmatpush1.msra.mxu0 0.0
    %701 = vmatprep.subr.mxu0 0.0
    %702 = vmatpush1.msra.mxu0 0.0
    %703 = vmatprep.subr.mxu0 0.0
    %704 = vmatpush1.msra.mxu0 0.0
    %705 = vmatprep.subr.mxu0 0.0
    %706 = vmatpush1.msra.mxu0 0.0
    %707 = vmatprep.subr.mxu0 0.0
    %708 = vmatpush1.msra.mxu0 0.0
    %709 = vmatprep.subr.mxu0 0.0
    %710 = vmatpush1.msra.mxu0 0.0
    %711 = vmatprep.subr.mxu0 0.0
    %712 = vmatpush1.msra.mxu0 0.0
    %713 = vmatprep.subr.mxu0 0.0
    %714 = vmatpush1.msra.mxu0 0.0
    %715 = vmatprep.subr.mxu0 0.0
    %716 = vmatpush1.msra.mxu0 0.0
    %717 = vmatprep.subr.mxu0 0.0
    %718 = vmatpush1.msra.mxu0 0.0
    %719 = vmatprep.subr.mxu0 0.0
    %720 = vmatpush1.msra.mxu0 0.0
    %721 = vmatprep.subr.mxu0 0.0
    %722 = vmatpush1.msra.mxu0 0.0
    %723 = vmatprep.subr.mxu0 0.0
    %724 = vmatpush1.msra.mxu0 0.0
    %725 = vmatprep.mubr.f32.mxu0 0.0
    %726 = vmatmul.mubr.f32.gmra.mrb[0].mxu0 %v646
    %v727 = vpop.f32.mrb[0].mxu0
    %v728 = vadd.f32 %v627, %v727
    %v729 = vpop.f32.mrb[0].mxu0
    %730 = vmatprep.mubr.f32.mxu0 0.0
    %731 = vmatmul.mubr.f32.gmra.mrb[0].mxu0 %v649
    %v732 = vpop.f32.mrb[0].mxu0
    %v733 = vadd.f32 %v632, %v732
    %v734 = vpop.f32.mrb[0].mxu0
    %735 = vmatprep.mubr.f32.mxu0 0.0
    %736 = vmatmul.mubr.f32.gmra.mrb[0].mxu0 %v652
    %v737 = vpop.f32.mrb[0].mxu0
    %v738 = vadd.f32 %v637, %v737
    %v739 = vpop.f32.mrb[0].mxu0
    %740 = vmatprep.mubr.f32.mxu0 0.0
    %741 = vmatmul.mubr.f32.gmra.mrb[0].mxu0 %v655
    %v742 = vpop.f32.mrb[0].mxu0
    %v743 = vadd.f32 %v642, %v742
    %v744 = vpop.f32.mrb[0].mxu0
    %745 = vdwg.mxu0
    %vm746 = vcmp.gt.f32.partialorder %v728, 0.0
    %vm747 = vcmp.gt.f32.partialorder %v733, 0.0
    %vm748 = vcmp.gt.f32.partialorder %v738, 0.0
    %vm749 = vcmp.gt.f32.partialorder %v743, 0.0
    %v750 = vmul.f32 %v728, 0.01
    %v751 = vmul.f32 %v733, 0.01
    %v752 = vmul.f32 %v738, 0.01
    %v753 = vmul.f32 %v743, 0.01
    %v754 = vsel %vm746, %v728, %v750
    %v755 = vsel %vm747, %v733, %v751
    %v756 = vsel %vm748, %v738, %v752
    %v757 = vsel %vm749, %v743, %v753
    %v758 = vld [vmem:[%s6] sm:$0x1]
    %v759 = vld [vmem:[#allocation7] sm:$0x1]
    %761 = vset.pattern.permute.xlu0 0
    %762 = vperm.xlu0 %761, %v759
    %v763 = vpop.permute.xlu0 %762
    %v765 = vlaneseq
    %v766 = vshrl.u32 %v765, 7
    %v767 = vsub.s32 0, %v766
    %v768 = vrot.slane %v763, %v767
    %v770 = vsel %vm45, %v758, 0
    %772 = vmatprep.subr.mxu0 0.0
    %773 = vmatpush1.msra.mxu0 %v754
    %774 = vmatprep.subr.mxu0 0.0
    %775 = vmatpush1.msra.mxu0 %v755
    %776 = vmatprep.subr.mxu0 0.0
    %777 = vmatpush1.msra.mxu0 %v756
    %778 = vmatprep.subr.mxu0 0.0
    %779 = vmatpush1.msra.mxu0 %v757
    %780 = vmatprep.subr.mxu0 0.0
    %781 = vmatpush1.msra.mxu0 0.0
    %782 = vmatprep.subr.mxu0 0.0
    %783 = vmatpush1.msra.mxu0 0.0
    %784 = vmatprep.subr.mxu0 0.0
    %785 = vmatpush1.msra.mxu0 0.0
    %786 = vmatprep.subr.mxu0 0.0
    %787 = vmatpush1.msra.mxu0 0.0
    %788 = vmatprep.subr.mxu0 0.0
    %789 = vmatpush1.msra.mxu0 0.0
    %790 = vmatprep.subr.mxu0 0.0
    %791 = vmatpush1.msra.mxu0 0.0
    %792 = vmatprep.subr.mxu0 0.0
    %793 = vmatpush1.msra.mxu0 0.0
    %794 = vmatprep.subr.mxu0 0.0
    %795 = vmatpush1.msra.mxu0 0.0
    %796 = vmatprep.subr.mxu0 0.0
    %797 = vmatpush1.msra.mxu0 0.0
    %798 = vmatprep.subr.mxu0 0.0
    %799 = vmatpush1.msra.mxu0 0.0
    %800 = vmatprep.subr.mxu0 0.0
    %801 = vmatpush1.msra.mxu0 0.0
    %802 = vmatprep.subr.mxu0 0.0
    %803 = vmatpush1.msra.mxu0 0.0
    %804 = vmatprep.subr.mxu0 0.0
    %805 = vmatpush1.msra.mxu0 0.0
    %806 = vmatprep.subr.mxu0 0.0
    %807 = vmatpush1.msra.mxu0 0.0
    %808 = vmatprep.subr.mxu0 0.0
    %809 = vmatpush1.msra.mxu0 0.0
    %810 = vmatprep.subr.mxu0 0.0
    %811 = vmatpush1.msra.mxu0 0.0
    %812 = vmatprep.subr.mxu0 0.0
    %813 = vmatpush1.msra.mxu0 0.0
    %814 = vmatprep.subr.mxu0 0.0
    %815 = vmatpush1.msra.mxu0 0.0
    %816 = vmatprep.subr.mxu0 0.0
    %817 = vmatpush1.msra.mxu0 0.0
    %818 = vmatprep.subr.mxu0 0.0
    %819 = vmatpush1.msra.mxu0 0.0
    %820 = vmatprep.subr.mxu0 0.0
    %821 = vmatpush1.msra.mxu0 0.0
    %822 = vmatprep.subr.mxu0 0.0
    %823 = vmatpush1.msra.mxu0 0.0
    %824 = vmatprep.subr.mxu0 0.0
    %825 = vmatpush1.msra.mxu0 0.0
    %826 = vmatprep.subr.mxu0 0.0
    %827 = vmatpush1.msra.mxu0 0.0
    %828 = vmatprep.subr.mxu0 0.0
    %829 = vmatpush1.msra.mxu0 0.0
    %830 = vmatprep.subr.mxu0 0.0
    %831 = vmatpush1.msra.mxu0 0.0
    %832 = vmatprep.subr.mxu0 0.0
    %833 = vmatpush1.msra.mxu0 0.0
    %834 = vmatprep.subr.mxu0 0.0
    %835 = vmatpush1.msra.mxu0 0.0
    %836 = vmatprep.mubr.f32.mxu0 0.0
    %837 = vmatmul.mubr.f32.gmra.mrb[0].mxu0 %v770
    %v838 = vpop.f32.mrb[0].mxu0
    %v839 = vadd.f32 %v768, %v838
    %v840 = vpop.f32.mrb[0].mxu0
    %841 = vdwg.mxu0
    %v842 = vxor.u32 %v839, 2147483648
    %v843 = vmul.f32 %v842, 1.442695
    %v844 = vpow.pop %v843
    %v845 = vadd.f32 %v844, 1.0
    %v846 = vrcp.pop %v845
    %v847 = vmul.f32 1.0, %v846
    %848 = vst [vmem:[%s8] sm:$0x1] %v847
    // Predicated region
    $region38: #{get_users_rating.1} parent=1 // pred_check
      _
    $region39: #{get_users_rating.1} parent=1 // pred_check_branch
      %850 = sbr.rel (0) target = $region41
    $region40: #{get_users_rating.1} parent=1 // pred_region
      _
    $region41: #{get_users_rating.1} parent=1 // pred_fallthru
      _
    // Predicated region
    $region42: #{get_users_rating.1} parent=1 // pred_check
      _
    $region43: #{get_users_rating.1} parent=1 // pred_check_branch
      %852 = sbr.rel (0) target = $region45
    $region44: #{get_users_rating.1} parent=1 // pred_region
      _
    $region45: #{get_users_rating.1} parent=1 // pred_fallthru
      _
    %853 = vsyncpa [#allocation9], 1

</llo_original>
